<compile_context>
chip_gen: v5e
topology: v5e:2x2
jax: 0.10.0
libtpu: 0.0.40
codegen_flags: <defaults>
</compile_context>

<pallas_src>
import functools

import jax
import jax.numpy as jnp
from jax import lax
from jax.experimental import pallas as pl
from jax.experimental.pallas import tpu as pltpu

_LANES = 128  # one full lane width; output channels are padded to this for dense stores


def _vmem_capacity_bytes():
    try:
        return int(pltpu.get_tpu_info().vmem_capacity_bytes)
    except Exception:
        return 64 * 1024 * 1024  # conservative (v7x per-TensorCore)


def _pick_tile_m(mq, max_tile=1024):
    """Largest row tile <= max_tile that is a multiple of 8 and divides Mq."""
    if mq <= max_tile:
        return mq
    for t in range(max_tile - max_tile % 8, 7, -8):
        if mq % t == 0:
            return t
    return mq  # fallback: single tile


def _parity_patches_and_weights(x_nhwc, weight, compute_dtype):
    """Split ConvTranspose2d(4, 2, 1) into 4 stride-1 2x2 correlations, one per output
    parity (oh%2, ow%2).  Returns patches (4, Mq, 4*Cin) and matching weight matrices
    (4, 4*Cin, Cout), Mq = N*H*W.  Output pixel (2o+po, 2w+pw) only ever touches kernel
    taps kh = 3-po-2*dy, kw = 3-pw-2*dx at input rows/cols (o-1+po+dy, w-1+pw+dx)."""
    N, H, W, Cin = x_nhwc.shape
    Cout = weight.shape[1]
    Mq, Kd = N * H * W, 4 * Cin
    xp = jnp.pad(x_nhwc, ((0, 0), (1, 1), (1, 1), (0, 0)))  # zero-pad 1 on each side
    patches, wmats = [], []
    for po in range(2):
        for pw in range(2):
            taps = [xp[:, po + dy:po + dy + H, pw + dx:pw + dx + W, :]
                    for dy in range(2) for dx in range(2)]
            patches.append(jnp.stack(taps, axis=3).reshape(Mq, Kd))
            wm = jnp.stack([weight[:, :, 3 - po - 2 * dy, 3 - pw - 2 * dx]
                            for dy in range(2) for dx in range(2)], axis=0)  # (4,Cin,Cout)
            wmats.append(wm.reshape(Kd, Cout))
    return (jnp.stack(patches, 0).astype(compute_dtype),
            jnp.stack(wmats, 0).astype(compute_dtype))


# ---------------------------------------------------------------------------
# Fused single-call path: conv + BN stats + normalize + tanh, conv stays in VMEM.
# ---------------------------------------------------------------------------
def _fused_kernel(p_ref, w_ref, g_ref, b_ref, o_ref,
                  conv_buf, sum_ref, sq_ref, scale_ref, shift_ref,
                  *, grid_m, inv_count, eps):
    ph = pl.program_id(0)   # 0: conv + stats, 1: normalize + tanh
    p = pl.program_id(1)    # output parity
    i = pl.program_id(2)    # row tile
    slot = p * grid_m + i
    first = jnp.logical_and(p == 0, i == 0)

    @pl.when(ph == 0)
    def _():
        @pl.when(first)
        def _():
            sum_ref[...] = jnp.zeros_like(sum_ref)
            sq_ref[...] = jnp.zeros_like(sq_ref)

        acc = jnp.dot(p_ref[0], w_ref[0], preferred_element_type=jnp.float32)
        conv_buf[slot] = acc
        sum_ref[...] += jnp.sum(acc, axis=0, keepdims=True)
        sq_ref[...] += jnp.sum(acc * acc, axis=0, keepdims=True)

    @pl.when(ph == 1)
    def _():
        @pl.when(first)
        def _():
            # single-pass E[x^2] - E[x]^2 in f32 (fine at these scales)
            mean = sum_ref[...] * inv_count
            var = sq_ref[...] * inv_count - mean * mean
            s = g_ref[...] * lax.rsqrt(var + eps)
            scale_ref[...] = s
            shift_ref[...] = b_ref[...] - mean * s

        o_ref[0] = jnp.tanh(conv_buf[slot] * scale_ref[...] + shift_ref[...])


def _fused_forward(patches, w_all, gamma_p, beta_p, *, tile_m, eps, vmem_limit_bytes):
    P4, Mq, Kd = patches.shape
    Cp = w_all.shape[-1]
    grid_m = Mq // tile_m
    inv_count = 1.0 / float(P4 * Mq)

    kern = functools.partial(_fused_kernel, grid_m=grid_m,
                             inv_count=inv_count, eps=float(eps))

    # Phase-aware index maps (pure int arithmetic on grid indices):
    #  - phase 1 pins inputs to the last phase-0 block -> no redundant re-fetch DMAs
    #  - phase 0 pins the (unwritten) output block to (0,0,0) -> no garbage writeback
    def patches_map(ph, p, i):
        return (p * (1 - ph) + 3 * ph, i * (1 - ph) + (grid_m - 1) * ph, 0)

    def w_map(ph, p, i):
        return (p * (1 - ph) + 3 * ph, 0, 0)

    def out_map(ph, p, i):
        return (p * ph, i * ph, 0)

    return pl.pallas_call(
        kern,
        out_shape=jax.ShapeDtypeStruct((P4, Mq, Cp), jnp.float32),
        grid_spec=pltpu.PrefetchScalarGridSpec(
            num_scalar_prefetch=0,
            grid=(2, P4, grid_m),
            in_specs=[
                pl.BlockSpec((1, tile_m, Kd), patches_map),
                pl.BlockSpec((1, Kd, Cp), w_map),
                pl.BlockSpec((1, Cp), lambda ph, p, i: (0, 0)),
                pl.BlockSpec((1, Cp), lambda ph, p, i: (0, 0)),
            ],
            out_specs=pl.BlockSpec((1, tile_m, Cp), out_map),
            scratch_shapes=[
                pltpu.VMEM((P4 * grid_m, tile_m, Cp), jnp.float32),  # resident conv
                pltpu.VMEM((1, Cp), jnp.float32),                    # sum
                pltpu.VMEM((1, Cp), jnp.float32),                    # sum of squares
                pltpu.VMEM((1, Cp), jnp.float32),                    # scale
                pltpu.VMEM((1, Cp), jnp.float32),                    # shift
            ]),
        compiler_params=pltpu.CompilerParams(
            dimension_semantics=("arbitrary", "arbitrary", "arbitrary"),
            vmem_limit_bytes=vmem_limit_bytes),
    )(patches, w_all, gamma_p, beta_p)


# ---------------------------------------------------------------------------
# Fallback two-call path (conv doesn't fit VMEM): per-tile partial BN stats so the
# grid is fully "parallel" (v7x megacore), partials reduced in tiny JAX glue.
# ---------------------------------------------------------------------------
def _conv_partial_stats_kernel(p_ref, w_ref, o_ref, sum_ref, sq_ref):
    acc = jnp.dot(p_ref[0], w_ref[0], preferred_element_type=jnp.float32)
    o_ref[0] = acc
    s = jnp.sum(acc, axis=0, keepdims=True)
    q = jnp.sum(acc * acc, axis=0, keepdims=True)
    sum_ref[...] = jnp.broadcast_to(s[None, None], sum_ref.shape)
    sq_ref[...] = jnp.broadcast_to(q[None, None], sq_ref.shape)


def _bn_tanh_kernel(x_ref, scale_ref, shift_ref, o_ref):
    o_ref[0] = jnp.tanh(x_ref[0] * scale_ref[...] + shift_ref[...])


def _two_pass_forward(patches, w_all, gamma_p, beta_p, *, tile_m, eps):
    P4, Mq, Kd = patches.shape
    Cp = w_all.shape[-1]
    grid_m = Mq // tile_m
    count = float(P4 * Mq)

    conv_out, psum, psq = pl.pallas_call(
        _conv_partial_stats_kernel,
        out_shape=(
            jax.ShapeDtypeStruct((P4, Mq, Cp), jnp.float32),
            jax.ShapeDtypeStruct((P4, grid_m, 8, Cp), jnp.float32),
            jax.ShapeDtypeStruct((P4, grid_m, 8, Cp), jnp.float32),
        ),
        grid_spec=pltpu.PrefetchScalarGridSpec(
            num_scalar_prefetch=0,
            grid=(P4, grid_m),
            in_specs=[
                pl.BlockSpec((1, tile_m, Kd), lambda p, i: (p, i, 0)),
                pl.BlockSpec((1, Kd, Cp), lambda p, i: (p, 0, 0)),
            ],
            out_specs=(
                pl.BlockSpec((1, tile_m, Cp), lambda p, i: (p, i, 0)),
                pl.BlockSpec((1, 1, 8, Cp), lambda p, i: (p, i, 0, 0)),
                pl.BlockSpec((1, 1, 8, Cp), lambda p, i: (p, i, 0, 0)),
            )),
        compiler_params=pltpu.CompilerParams(
            dimension_semantics=("parallel", "parallel")),
    )(patches, w_all)

    # tiny per-channel glue: reduce per-tile partials, fold into affine scale/shift
    csum = jnp.sum(psum[:, :, 0, :], axis=(0, 1))[None, :]
    csq = jnp.sum(psq[:, :, 0, :], axis=(0, 1))[None, :]
    mean = csum / count
    var = csq / count - mean * mean
    scale = gamma_p * lax.rsqrt(var + eps)
    shift = beta_p - mean * scale

    # TODO(synk): when Cout << 128, pack 128//Cout rows per lane-dense store to shrink
    # this HBM intermediate (and kernel-2 traffic) instead of padding channels to 128.
    return pl.pallas_call(
        _bn_tanh_kernel,
        out_shape=jax.ShapeDtypeStruct((P4, Mq, Cp), jnp.float32),
        grid_spec=pltpu.PrefetchScalarGridSpec(
            num_scalar_prefetch=0,
            grid=(P4, grid_m),
            in_specs=[
                pl.BlockSpec((1, tile_m, Cp), lambda p, i: (p, i, 0)),
                pl.BlockSpec((1, Cp), lambda p, i: (0, 0)),
                pl.BlockSpec((1, Cp), lambda p, i: (0, 0)),
            ],
            out_specs=pl.BlockSpec((1, tile_m, Cp), lambda p, i: (p, i, 0))),
        compiler_params=pltpu.CompilerParams(
            dimension_semantics=("parallel", "parallel")),
    )(conv_out, scale, shift)


# ---------------------------------------------------------------------------
# Public wrapper (PyTorch NCHW in / NCHW out).
# ---------------------------------------------------------------------------
def decnn_cell_forward(x, weight, bias, gamma, beta, eps=1e-5,
                       max_tile_m=1024, use_bf16=False):
    """x: (N, Cin, H, W); weight: (Cin, Cout, 4, 4) (PyTorch ConvTranspose2d layout);
    bias/gamma/beta: (Cout,).  Returns (N, Cout, 2H, 2W)."""
    # Per-channel bias before train-mode BatchNorm is exactly cancelled by the mean
    # subtraction -> mathematically a no-op, so it is dropped from the kernel.
    del bias
    N, Cin, H, W = x.shape
    Cout = weight.shape[1]
    assert weight.shape == (Cin, Cout, 4, 4)
    assert Cout <= _LANES, "kernel keeps all output channels in one 128-lane tile"

    compute_dtype = jnp.bfloat16 if use_bf16 else jnp.float32  # bf16 = MXU-rate opt-in
    x_nhwc = jnp.transpose(x, (0, 2, 3, 1)).astype(jnp.float32)
    patches, wmats = _parity_patches_and_weights(
        x_nhwc, weight.astype(jnp.float32), compute_dtype)
    P4, Mq, Kd = patches.shape
    Cp = _LANES
    w_all = jnp.zeros((P4, Kd, Cp), compute_dtype).at[:, :, :Cout].set(wmats)
    gamma_p = jnp.zeros((1, Cp), jnp.float32).at[0, :Cout].set(gamma.astype(jnp.float32))
    beta_p = jnp.zeros((1, Cp), jnp.float32).at[0, :Cout].set(beta.astype(jnp.float32))

    tile_m = _pick_tile_m(Mq, max_tile_m)
    grid_m = Mq // tile_m

    # Gate the fused (single-call, conv kept on-chip) path on the VMEM budget of the
    # current TPU generation (64 MiB per TensorCore on v7x, 128 MiB on v5e/v6e).
    vmem_cap = _vmem_capacity_bytes()
    est = (P4 * grid_m * tile_m * Cp * 4                              # resident conv buffer
           + 2 * tile_m * (Kd * patches.dtype.itemsize + Cp * 4)      # double-buffered tiles
           + 2 * Kd * Cp * w_all.dtype.itemsize + 64 * Cp * 4)
    if est <= 0.45 * vmem_cap:
        vmem_limit = int(min(0.9 * vmem_cap, max(est + (16 << 20), 32 << 20)))
        y = _fused_forward(patches, w_all, gamma_p, beta_p, tile_m=tile_m,
                           eps=eps, vmem_limit_bytes=vmem_limit)
    else:
        y = _two_pass_forward(patches, w_all, gamma_p, beta_p, tile_m=tile_m, eps=eps)

    # (po, pw, n, o, w, c) -> (n, c, o, po, w, pw) -> (N, Cp, 2H, 2W)
    y = y.reshape(2, 2, N, H, W, Cp)
    y = jnp.transpose(y, (2, 5, 3, 0, 4, 1)).reshape(N, Cp, 2 * H, 2 * W)
    return y[:, :Cout]


def _reference(x, weight, bias, gamma, beta, eps=1e-5):
    """Pure-JAX reference of the PyTorch forward (train-mode BatchNorm)."""
    w_conv = jnp.transpose(weight[:, :, ::-1, ::-1], (1, 0, 2, 3))  # (Cout, Cin, kh, kw)
    conv = lax.conv_general_dilated(
        x, w_conv, window_strides=(1, 1), padding=[(2, 2), (2, 2)],
        lhs_dilation=(2, 2), dimension_numbers=('NCHW', 'OIHW', 'NCHW'))
    conv = conv + bias[None, :, None, None]
    mean = jnp.mean(conv, axis=(0, 2, 3), keepdims=True)
    var = jnp.mean((conv - mean) ** 2, axis=(0, 2, 3), keepdims=True)
    norm = (conv - mean) * lax.rsqrt(var + eps)
    return jnp.tanh(norm * gamma[None, :, None, None] + beta[None, :, None, None])


if __name__ == "__main__":
    key = jax.random.PRNGKey(0)
    k_x, k_w, k_b = jax.random.split(key, 3)

    N, Cin, Cout, H, W = 2, 4, 8, 16, 16   # output spatial 32x32, Mq = N*H*W = 512

    x = jax.random.normal(k_x, (N, Cin, H, W), jnp.float32)
    fan = Cin * 4 * 4
    weight = jax.random.normal(k_w, (Cin, Cout, 4, 4), jnp.float32) / jnp.sqrt(jnp.float32(fan))
    bias = jax.random.normal(k_b, (Cout,), jnp.float32) * 0.1
    gamma = jnp.ones((Cout,), jnp.float32)   # BatchNorm2d default weight init
    beta = jnp.zeros((Cout,), jnp.float32)   # BatchNorm2d default bias init

    out = decnn_cell_forward(x, weight, bias, gamma, beta)
    out = jax.block_until_ready(out)

    ref = _reference(x, weight, bias, gamma, beta)
    assert out.shape == (N, Cout, 2 * H, 2 * W), out.shape
    err = float(jnp.max(jnp.abs(out - ref)))
    assert jnp.allclose(out, ref, atol=1e-4, rtol=1e-4), err

    print("KERNEL_OK")
</pallas_src>

<mosaic_0001>
module attributes {stable_mosaic.version = 11 : i64} {
  func.func @_fused_kernel(%arg0: i32, %arg1: i32, %arg2: i32, %arg3: memref<1x512x16xf32, #tpu.memory_space<vmem>>, %arg4: memref<1x16x128xf32, #tpu.memory_space<vmem>>, %arg5: memref<1x128xf32, #tpu.memory_space<vmem>>, %arg6: memref<1x128xf32, #tpu.memory_space<vmem>>, %arg7: memref<1x512x128xf32, #tpu.memory_space<vmem>>, %arg8: memref<4x512x128xf32, #tpu.memory_space<vmem>>, %arg9: memref<1x128xf32, #tpu.memory_space<vmem>>, %arg10: memref<1x128xf32, #tpu.memory_space<vmem>>, %arg11: memref<1x128xf32, #tpu.memory_space<vmem>>, %arg12: memref<1x128xf32, #tpu.memory_space<vmem>>) attributes {dimension_semantics = [#tpu.dimension_semantics<arbitrary>, #tpu.dimension_semantics<arbitrary>, #tpu.dimension_semantics<arbitrary>], iteration_bounds = array<i64: 2, 4, 1>, scalar_prefetch = 0 : i64, scratch_operands = 5 : i64, tpu.core_type = #tpu.core_type<tc>, window_params = [{transform_indices = @transform_0, window_bounds = array<i64: 1, 512, 16>}, {transform_indices = @transform_1, window_bounds = array<i64: 1, 16, 128>}, {pipeline_mode = #tpu.pipeline_mode<synchronous>, transform_indices = @transform_2, window_bounds = array<i64: 1, 128>}, {pipeline_mode = #tpu.pipeline_mode<synchronous>, transform_indices = @transform_3, window_bounds = array<i64: 1, 128>}, {transform_indices = @transform_4, window_bounds = array<i64: 1, 512, 128>}]} {
    %c1_i32 = arith.constant 1 : i32
    %0 = arith.muli %arg1, %c1_i32 : i32
    %1 = arith.addi %0, %arg2 : i32
    %c0_i32 = arith.constant 0 : i32
    %2 = arith.cmpi eq, %arg1, %c0_i32 : i32
    %c0_i32_0 = arith.constant 0 : i32
    %3 = arith.cmpi eq, %arg2, %c0_i32_0 : i32
    %4 = arith.andi %2, %3 : i1
    %c0_i32_1 = arith.constant 0 : i32
    %5 = arith.cmpi eq, %arg0, %c0_i32_1 : i32
    %6 = arith.extui %5 : i1 to i32
    %c0_i32_2 = arith.constant 0 : i32
    %7 = arith.cmpi ne, %6, %c0_i32_2 : i32
    scf.if %7 {
      %11 = arith.extui %4 : i1 to i32
      %c0_i32_5 = arith.constant 0 : i32
      %12 = arith.cmpi ne, %11, %c0_i32_5 : i32
      scf.if %12 {
        %cst_23 = arith.constant 0.000000e+00 : f32
        %33 = vector.broadcast %cst_23 : f32 to vector<1x128xf32>
        %c0_24 = arith.constant 0 : index
        %c0_25 = arith.constant 0 : index
        %34 = vector.load %arg9[%c0_24, %c0_25] : memref<1x128xf32, #tpu.memory_space<vmem>>, vector<1x128xf32>
        tpu.vector_store %arg9[%c0_24, %c0_25], %33 {strides = array<i32>} : memref<1x128xf32, #tpu.memory_space<vmem>>, vector<1x128xf32>,
        %cst_26 = arith.constant 0.000000e+00 : f32
        %35 = vector.broadcast %cst_26 : f32 to vector<1x128xf32>
        %c0_27 = arith.constant 0 : index
        %c0_28 = arith.constant 0 : index
        %36 = vector.load %arg10[%c0_27, %c0_28] : memref<1x128xf32, #tpu.memory_space<vmem>>, vector<1x128xf32>
        tpu.vector_store %arg10[%c0_27, %c0_28], %35 {strides = array<i32>} : memref<1x128xf32, #tpu.memory_space<vmem>>, vector<1x128xf32>,
      } else {
      }
      %c0 = arith.constant 0 : index
      %c0_6 = arith.constant 0 : index
      %c0_7 = arith.constant 0 : index
      %13 = vector.load %arg3[%c0, %c0_6, %c0_7] : memref<1x512x16xf32, #tpu.memory_space<vmem>>, vector<1x512x16xf32>
      %14 = vector.shape_cast %13 : vector<1x512x16xf32> to vector<512x16xf32>
      %c0_8 = arith.constant 0 : index
      %c0_9 = arith.constant 0 : index
      %c0_10 = arith.constant 0 : index
      %15 = vector.load %arg4[%c0_8, %c0_9, %c0_10] : memref<1x16x128xf32, #tpu.memory_space<vmem>>, vector<1x16x128xf32>
      %16 = vector.shape_cast %15 : vector<1x16x128xf32> to vector<16x128xf32>
      %cst = arith.constant dense<0.000000e+00> : vector<512x128xf32>
      %17 = tpu.matmul %14, %16, %cst {dimension_numbers = #tpu.dot_dimension_numbers<[1], [0], [0], [1], [0, 0, 1, 1], [], []>} : vector<512x16xf32>, vector<16x128xf32>, vector<512x128xf32> -> vector<512x128xf32>
      %18 = arith.index_cast %1 : i32 to index
      %c0_11 = arith.constant 0 : index
      %c0_12 = arith.constant 0 : index
      %19 = vector.load %arg8[%18, %c0_11, %c0_12] : memref<4x512x128xf32, #tpu.memory_space<vmem>>, vector<1x512x128xf32>
      %20 = vector.shape_cast %19 : vector<1x512x128xf32> to vector<512x128xf32>
      %21 = vector.shape_cast %17 : vector<512x128xf32> to vector<1x512x128xf32>
      tpu.vector_store %arg8[%18, %c0_11, %c0_12], %21 {strides = array<i32>} : memref<4x512x128xf32, #tpu.memory_space<vmem>>, vector<1x512x128xf32>,
      %c0_13 = arith.constant 0 : index
      %c0_14 = arith.constant 0 : index
      %22 = vector.load %arg9[%c0_13, %c0_14] : memref<1x128xf32, #tpu.memory_space<vmem>>, vector<1x128xf32>
      %cst_15 = arith.constant dense<0.000000e+00> : vector<128xf32>
      %23 = vector.multi_reduction <add>, %17, %cst_15 [0] : vector<512x128xf32> to vector<128xf32>
      %24 = vector.shape_cast %23 : vector<128xf32> to vector<1x128xf32>
      %25 = arith.addf %22, %24 : vector<1x128xf32>
      %c0_16 = arith.constant 0 : index
      %c0_17 = arith.constant 0 : index
      %26 = vector.load %arg9[%c0_16, %c0_17] : memref<1x128xf32, #tpu.memory_space<vmem>>, vector<1x128xf32>
      tpu.vector_store %arg9[%c0_16, %c0_17], %25 {strides = array<i32>} : memref<1x128xf32, #tpu.memory_space<vmem>>, vector<1x128xf32>,
      %c0_18 = arith.constant 0 : index
      %c0_19 = arith.constant 0 : index
      %27 = vector.load %arg10[%c0_18, %c0_19] : memref<1x128xf32, #tpu.memory_space<vmem>>, vector<1x128xf32>
      %28 = arith.mulf %17, %17 : vector<512x128xf32>
      %cst_20 = arith.constant dense<0.000000e+00> : vector<128xf32>
      %29 = vector.multi_reduction <add>, %28, %cst_20 [0] : vector<512x128xf32> to vector<128xf32>
      %30 = vector.shape_cast %29 : vector<128xf32> to vector<1x128xf32>
      %31 = arith.addf %27, %30 : vector<1x128xf32>
      %c0_21 = arith.constant 0 : index
      %c0_22 = arith.constant 0 : index
      %32 = vector.load %arg10[%c0_21, %c0_22] : memref<1x128xf32, #tpu.memory_space<vmem>>, vector<1x128xf32>
      tpu.vector_store %arg10[%c0_21, %c0_22], %31 {strides = array<i32>} : memref<1x128xf32, #tpu.memory_space<vmem>>, vector<1x128xf32>,
    } else {
    }
    %c1_i32_3 = arith.constant 1 : i32
    %8 = arith.cmpi eq, %arg0, %c1_i32_3 : i32
    %9 = arith.extui %8 : i1 to i32
    %c0_i32_4 = arith.constant 0 : i32
    %10 = arith.cmpi ne, %9, %c0_i32_4 : i32
    scf.if %10 {
      %11 = arith.extui %4 : i1 to i32
      %c0_i32_5 = arith.constant 0 : i32
      %12 = arith.cmpi ne, %11, %c0_i32_5 : i32
      scf.if %12 {
        %c0_14 = arith.constant 0 : index
        %c0_15 = arith.constant 0 : index
        %26 = vector.load %arg9[%c0_14, %c0_15] : memref<1x128xf32, #tpu.memory_space<vmem>>, vector<1x128xf32>
        %cst = arith.constant 4.8828125E-4 : f32
        %27 = vector.broadcast %cst : f32 to vector<1x128xf32>
        %28 = arith.mulf %26, %27 : vector<1x128xf32>
        %c0_16 = arith.constant 0 : index
        %c0_17 = arith.constant 0 : index
        %29 = vector.load %arg10[%c0_16, %c0_17] : memref<1x128xf32, #tpu.memory_space<vmem>>, vector<1x128xf32>
        %cst_18 = arith.constant 4.8828125E-4 : f32
        %30 = vector.broadcast %cst_18 : f32 to vector<1x128xf32>
        %31 = arith.mulf %29, %30 : vector<1x128xf32>
        %32 = arith.mulf %28, %28 : vector<1x128xf32>
        %33 = arith.subf %31, %32 : vector<1x128xf32>
        %c0_19 = arith.constant 0 : index
        %c0_20 = arith.constant 0 : index
        %34 = vector.load %arg5[%c0_19, %c0_20] : memref<1x128xf32, #tpu.memory_space<vmem>>, vector<1x128xf32>
        %cst_21 = arith.constant 9.99999974E-6 : f32
        %35 = vector.broadcast %cst_21 : f32 to vector<1x128xf32>
        %36 = arith.addf %33, %35 : vector<1x128xf32>
        %37 = math.rsqrt %36 : vector<1x128xf32>
        %38 = arith.mulf %34, %37 : vector<1x128xf32>
        %c0_22 = arith.constant 0 : index
        %c0_23 = arith.constant 0 : index
        %39 = vector.load %arg11[%c0_22, %c0_23] : memref<1x128xf32, #tpu.memory_space<vmem>>, vector<1x128xf32>
        tpu.vector_store %arg11[%c0_22, %c0_23], %38 {strides = array<i32>} : memref<1x128xf32, #tpu.memory_space<vmem>>, vector<1x128xf32>,
        %c0_24 = arith.constant 0 : index
        %c0_25 = arith.constant 0 : index
        %40 = vector.load %arg6[%c0_24, %c0_25] : memref<1x128xf32, #tpu.memory_space<vmem>>, vector<1x128xf32>
        %41 = arith.mulf %28, %38 : vector<1x128xf32>
        %42 = arith.subf %40, %41 : vector<1x128xf32>
        %c0_26 = arith.constant 0 : index
        %c0_27 = arith.constant 0 : index
        %43 = vector.load %arg12[%c0_26, %c0_27] : memref<1x128xf32, #tpu.memory_space<vmem>>, vector<1x128xf32>
        tpu.vector_store %arg12[%c0_26, %c0_27], %42 {strides = array<i32>} : memref<1x128xf32, #tpu.memory_space<vmem>>, vector<1x128xf32>,
      } else {
      }
      %13 = arith.index_cast %1 : i32 to index
      %c0 = arith.constant 0 : index
      %c0_6 = arith.constant 0 : index
      %14 = vector.load %arg8[%13, %c0, %c0_6] : memref<4x512x128xf32, #tpu.memory_space<vmem>>, vector<1x512x128xf32>
      %15 = vector.shape_cast %14 : vector<1x512x128xf32> to vector<512x128xf32>
      %c0_7 = arith.constant 0 : index
      %c0_8 = arith.constant 0 : index
      %16 = vector.load %arg11[%c0_7, %c0_8] : memref<1x128xf32, #tpu.memory_space<vmem>>, vector<1x128xf32>
      %17 = vector.broadcast %16 : vector<1x128xf32> to vector<512x128xf32>
      %18 = arith.mulf %15, %17 : vector<512x128xf32>
      %c0_9 = arith.constant 0 : index
      %c0_10 = arith.constant 0 : index
      %19 = vector.load %arg12[%c0_9, %c0_10] : memref<1x128xf32, #tpu.memory_space<vmem>>, vector<1x128xf32>
      %20 = vector.broadcast %19 : vector<1x128xf32> to vector<512x128xf32>
      %21 = arith.addf %18, %20 : vector<512x128xf32>
      %22 = math.tanh %21 : vector<512x128xf32>
      %c0_11 = arith.constant 0 : index
      %c0_12 = arith.constant 0 : index
      %c0_13 = arith.constant 0 : index
      %23 = vector.load %arg7[%c0_11, %c0_12, %c0_13] : memref<1x512x128xf32, #tpu.memory_space<vmem>>, vector<1x512x128xf32>
      %24 = vector.shape_cast %23 : vector<1x512x128xf32> to vector<512x128xf32>
      %25 = vector.shape_cast %22 : vector<512x128xf32> to vector<1x512x128xf32>
      tpu.vector_store %arg7[%c0_11, %c0_12, %c0_13], %25 {strides = array<i32>} : memref<1x512x128xf32, #tpu.memory_space<vmem>>, vector<1x512x128xf32>,
    } else {
    }
    return
  }
  func.func @transform_0(%arg0: i32, %arg1: i32, %arg2: i32) -> (i32, i32, i32) {
    %c1_i32 = arith.constant 1 : i32
    %0 = arith.subi %c1_i32, %arg0 : i32
    %1 = arith.muli %arg1, %0 : i32
    %c3_i32 = arith.constant 3 : i32
    %2 = arith.muli %c3_i32, %arg0 : i32
    %3 = arith.addi %1, %2 : i32
    %c1_i32_0 = arith.constant 1 : i32
    %4 = arith.subi %c1_i32_0, %arg0 : i32
    %5 = arith.muli %arg2, %4 : i32
    %c0_i32 = arith.constant 0 : i32
    %6 = arith.muli %c0_i32, %arg0 : i32
    %7 = arith.addi %5, %6 : i32
    %c0_i32_1 = arith.constant 0 : i32
    %c0_i32_2 = arith.constant 0 : i32
    return %3, %7, %c0_i32_1 : i32, i32, i32
  }
  func.func @transform_1(%arg0: i32, %arg1: i32, %arg2: i32) -> (i32, i32, i32) {
    %c1_i32 = arith.constant 1 : i32
    %0 = arith.subi %c1_i32, %arg0 : i32
    %1 = arith.muli %arg1, %0 : i32
    %c3_i32 = arith.constant 3 : i32
    %2 = arith.muli %c3_i32, %arg0 : i32
    %3 = arith.addi %1, %2 : i32
    %c0_i32 = arith.constant 0 : i32
    %c0_i32_0 = arith.constant 0 : i32
    %c0_i32_1 = arith.constant 0 : i32
    return %3, %c0_i32, %c0_i32_0 : i32, i32, i32
  }
  func.func @transform_2(%arg0: i32, %arg1: i32, %arg2: i32) -> (i32, i32) {
    %c0_i32 = arith.constant 0 : i32
    %c0_i32_0 = arith.constant 0 : i32
    %c0_i32_1 = arith.constant 0 : i32
    return %c0_i32, %c0_i32_0 : i32, i32
  }
  func.func @transform_3(%arg0: i32, %arg1: i32, %arg2: i32) -> (i32, i32) {
    %c0_i32 = arith.constant 0 : i32
    %c0_i32_0 = arith.constant 0 : i32
    %c0_i32_1 = arith.constant 0 : i32
    return %c0_i32, %c0_i32_0 : i32, i32
  }
  func.func @transform_4(%arg0: i32, %arg1: i32, %arg2: i32) -> (i32, i32, i32) {
    %0 = arith.muli %arg1, %arg0 : i32
    %1 = arith.muli %arg2, %arg0 : i32
    %c0_i32 = arith.constant 0 : i32
    %c0_i32_0 = arith.constant 0 : i32
    return %0, %1, %c0_i32 : i32, i32, i32
  }
}

</mosaic_0001>

<llo_original>
// kernel: tpu_custom_call.1
$region0: #{tpu_custom_call.1}
  #allocation0 [shape = 'u32[]', space=smem, size = 0x4, offset = 0x4, fixed_abs, tag = 'smem constant byte address 0x4 - core index']
  #allocation1 [shape = 'u32[72,128]{1,0:T(1,128)}', space=vmem, size = 0x9000, scoped, tag = 'internal scratch']
  #allocation2 [shape = 'f32[4,512,128]{2,1,0:T(8,128)}', space=vmem, size = 0x100000, scoped, tag = 'scratch operand']
  #allocation3 [shape = 'f32[1,128]{1,0:T(1,128)}', space=vmem, size = 0x200, scoped, tag = 'scratch operand']
  #allocation4 [shape = 'f32[1,128]{1,0:T(1,128)}', space=vmem, size = 0x200, scoped, tag = 'scratch operand']
  #allocation5 [shape = 'f32[1,128]{1,0:T(1,128)}', space=vmem, size = 0x200, scoped, tag = 'scratch operand']
  #allocation6 [shape = 'f32[1,128]{1,0:T(1,128)}', space=vmem, size = 0x200, scoped, tag = 'scratch operand']
  %s0 = inlined_call_operand.vmem [shape: f32[4,512,16], index: 0, kind: input, shape index: {}]
  %s1 = inlined_call_operand.vmem [shape: f32[4,16,128], index: 1, kind: input, shape index: {}]
  %s2 = inlined_call_operand.vmem [shape: f32[1,128], index: 2, kind: input, shape index: {}]
  %s3 = inlined_call_operand.vmem [shape: f32[1,128], index: 3, kind: input, shape index: {}]
  %s4 = inlined_call_operand.hbm [shape: f32[4,512,128], index: 4, kind: output, shape index: {}]
  %s5 = sld [smem:[#allocation0]]
  $region65: #{tpu_custom_call.1} parent=0
    _
  %s7 = ssub.s32 1, %s5
  %s8 = scalar_select 0, %s7, %s5
  $region1: #{tpu_custom_call.1} parent=0
    #allocation7 [shape = 'u8[524288]{0}', space=vmem, size = 0x80000, scoped, tag = 'output window, operand 0']
    #allocation8 [shape = 's32[2]{0}', space=sflag, size = 0x8, scoped, tag = 'scoped memory for tpu_custom_call.1']
    %9 = vsyncpa [#allocation8], 0
    %s10 = scalar_lea.sflag [#allocation8], 1
    %11 = vsyncpa %s10, 0
    loop: start=0, step=1, limit=10
    $region2: #{tpu_custom_call.1} parent=1 // loop_pre_header
      _
    $region3: #{tpu_custom_call.1} parent=1 // loop_header
      %s13 = sphi 0, %s17
      %p14 = scmp.ge.s32.totalorder %s13, 10
      %s20 = sphi 0, %s39
      %s21 = sphi 0, %s35
      %s22 = sphi 0, %s31
      %s23 = sphi 0, %s20
      %s24 = sphi 0, %s21
      %s25 = sphi 0, %s22
      %s26 = sphi 0, %s23
      %s27 = sphi 0, %s24
      %s28 = sphi 0, %s25
      %s54 = sphi 0, %s56
      %s57 = sphi 0, %s54
      %s58 = sphi 0, %s57
      %s74 = sphi 0, %s58
      %s88 = sphi 0, %s90
      %s91 = sphi 0, %s88
      %s92 = sphi 0, %s91
      %s108 = sphi 0, %s92
      %s112 = sphi 0, %s112
      %s114 = sphi 0, %s112
      %s115 = sphi 0, %s114
      %s129 = sphi 0, %s115
      %s133 = sphi 0, %s133
      %s135 = sphi 0, %s133
      %s136 = sphi 0, %s135
      %s150 = sphi 0, %s136
      %s162 = sphi 0, %s164
      %s165 = sphi 0, %s162
      %s166 = sphi 0, %s165
      %s182 = sphi 0, %s166
    $region4: #{tpu_custom_call.1} parent=1 // loop_header_branch
      %16 = sbr.rel (%p14) target = $region8
    $region5: #{tpu_custom_call.1} parent=1 // loop_body
      %s18 = ssub.s32 %s13, 1
      %s19 = ssub.s32 %s13, 2
      %s29 = sadd.s32 1, %s22
      %p30 = scmp.ge.s32.totalorder %s29, 1
      %s31 = scalar_select %p30, 0, %s29
      %s32 = sadd.s32 1, %s21
      %s33 = scalar_select %p30, %s32, %s21
      %p34 = scmp.ge.s32.totalorder %s33, 4
      %s35 = scalar_select %p34, 0, %s33
      %s36 = sadd.s32 1, %s20
      %s37 = scalar_select %p34, %s36, %s20
      %p38 = scmp.ge.s32.totalorder %s37, 2
      %s39 = scalar_select %p38, 0, %s37
      %s40 = ssub.s32 1, %s20
      %s41 = smul.u32 %s21, %s40
      %s42 = smul.u32 %s20, 3
      %s43 = sadd.s32 %s41, %s42
      %s44 = smul.u32 %s22, %s40
      %s45 = ssub.s32 1, %s39
      %s46 = smul.u32 %s35, %s45
      %s47 = smul.u32 %s39, 3
      %s48 = sadd.s32 %s46, %s47
      %s49 = smul.u32 %s31, %s45
      %s50 = ssub.s32 %s43, %s48
      %s51 = ssub.s32 %s44, %s49
      %s52 = sor.u32 %s50, %s51
      %p53 = scmp.eq.s32.totalorder %s52, 0
      %s55 = sadd.s32 %s54, 1
      %s56 = scalar_select %p53, %s54, %s55
      %p59 = pneg %p53
      %p60 = scmp.eq.s32.totalorder %s13, 7
      %p61 = por %p59, %p60
      %p62 = scmp.ne.s32.totalorder %s54, %s57
      %p63 = scmp.eq.s32.totalorder %s13, 0
      %p64 = por %p62, %p63
      %p65 = scmp.ne.s32.totalorder %s54, %s57
      %p66 = scmp.eq.s32.totalorder %s18, 7
      %p67 = por %p65, %p66
      %p68 = scmp.ne.s32.totalorder %s57, %s58
      %p69 = scmp.eq.s32.totalorder %s18, 0
      %p70 = por %p68, %p69
      %p71 = scmp.ne.s32.totalorder %s57, %s58
      %p72 = scmp.eq.s32.totalorder %s19, 7
      %p73 = por %p71, %p72
      %p75 = scmp.ne.s32.totalorder %s58, %s74
      %p76 = scmp.eq.s32.totalorder %s19, 0
      %p77 = por %p75, %p76
      %s78 = ssub.s32 1, %s20
      %s79 = smul.u32 %s21, %s78
      %s80 = smul.u32 %s20, 3
      %s81 = sadd.s32 %s79, %s80
      %s82 = ssub.s32 1, %s39
      %s83 = smul.u32 %s35, %s82
      %s84 = smul.u32 %s39, 3
      %s85 = sadd.s32 %s83, %s84
      %s86 = ssub.s32 %s81, %s85
      %p87 = scmp.eq.s32.totalorder %s86, 0
      %s89 = sadd.s32 %s88, 1
      %s90 = scalar_select %p87, %s88, %s89
      %p93 = pneg %p87
      %p94 = scmp.eq.s32.totalorder %s13, 7
      %p95 = por %p93, %p94
      %p96 = scmp.ne.s32.totalorder %s88, %s91
      %p97 = scmp.eq.s32.totalorder %s13, 0
      %p98 = por %p96, %p97
      %p99 = scmp.ne.s32.totalorder %s88, %s91
      %p100 = scmp.eq.s32.totalorder %s18, 7
      %p101 = por %p99, %p100
      %p102 = scmp.ne.s32.totalorder %s91, %s92
      %p103 = scmp.eq.s32.totalorder %s18, 0
      %p104 = por %p102, %p103
      %p105 = scmp.ne.s32.totalorder %s91, %s92
      %p106 = scmp.eq.s32.totalorder %s19, 7
      %p107 = por %p105, %p106
      %p109 = scmp.ne.s32.totalorder %s92, %s108
      %p110 = scmp.eq.s32.totalorder %s19, 0
      %p111 = por %p109, %p110
      %s113 = sadd.s32 %s112, 1
      %p116 = scmp.eq.s32.totalorder %s13, 7
      %p117 = scmp.ne.s32.totalorder %s112, %s114
      %p118 = scmp.eq.s32.totalorder %s13, 0
      %p119 = por %p117, %p118
      %p120 = scmp.ne.s32.totalorder %s112, %s114
      %p121 = scmp.eq.s32.totalorder %s18, 7
      %p122 = por %p120, %p121
      %p123 = scmp.ne.s32.totalorder %s114, %s115
      %p124 = scmp.eq.s32.totalorder %s18, 0
      %p125 = por %p123, %p124
      %p126 = scmp.ne.s32.totalorder %s114, %s115
      %p127 = scmp.eq.s32.totalorder %s19, 7
      %p128 = por %p126, %p127
      %p130 = scmp.ne.s32.totalorder %s115, %s129
      %p131 = scmp.eq.s32.totalorder %s19, 0
      %p132 = por %p130, %p131
      %s134 = sadd.s32 %s133, 1
      %p137 = scmp.eq.s32.totalorder %s13, 7
      %p138 = scmp.ne.s32.totalorder %s133, %s135
      %p139 = scmp.eq.s32.totalorder %s13, 0
      %p140 = por %p138, %p139
      %p141 = scmp.ne.s32.totalorder %s133, %s135
      %p142 = scmp.eq.s32.totalorder %s18, 7
      %p143 = por %p141, %p142
      %p144 = scmp.ne.s32.totalorder %s135, %s136
      %p145 = scmp.eq.s32.totalorder %s18, 0
      %p146 = por %p144, %p145
      %p147 = scmp.ne.s32.totalorder %s135, %s136
      %p148 = scmp.eq.s32.totalorder %s19, 7
      %p149 = por %p147, %p148
      %p151 = scmp.ne.s32.totalorder %s136, %s150
      %p152 = scmp.eq.s32.totalorder %s19, 0
      %p153 = por %p151, %p152
      %s154 = smul.u32 %s21, %s20
      %s155 = smul.u32 %s22, %s20
      %s156 = smul.u32 %s35, %s39
      %s157 = smul.u32 %s31, %s39
      %s158 = ssub.s32 %s154, %s156
      %s159 = ssub.s32 %s155, %s157
      %s160 = sor.u32 %s158, %s159
      %p161 = scmp.eq.s32.totalorder %s160, 0
      %s163 = sadd.s32 %s162, 1
      %s164 = scalar_select %p161, %s162, %s163
      %p167 = pneg %p161
      %p168 = scmp.eq.s32.totalorder %s13, 7
      %p169 = por %p167, %p168
      %p170 = scmp.ne.s32.totalorder %s162, %s165
      %p171 = scmp.eq.s32.totalorder %s13, 0
      %p172 = por %p170, %p171
      %p173 = scmp.ne.s32.totalorder %s162, %s165
      %p174 = scmp.eq.s32.totalorder %s18, 7
      %p175 = por %p173, %p174
      %p176 = scmp.ne.s32.totalorder %s165, %s166
      %p177 = scmp.eq.s32.totalorder %s18, 0
      %p178 = por %p176, %p177
      %p179 = scmp.ne.s32.totalorder %s165, %s166
      %p180 = scmp.eq.s32.totalorder %s19, 7
      %p181 = por %p179, %p180
      %p183 = scmp.ne.s32.totalorder %s166, %s182
      %p184 = scmp.eq.s32.totalorder %s19, 0
      %p185 = por %p183, %p184
      %p186 = scmp.le.s32.totalorder 1, %s13
      %p187 = scmp.lt.s32.totalorder %s13, 9
      %p188 = pnand %p186, %p187
      %p189 = pneg %p188
      // Predicated region
      $region9: #{tpu_custom_call.1} parent=5 // pred_check
        _
      $region10: #{tpu_custom_call.1} parent=5 // pred_check_branch
        %191 = sbr.rel (%p188) target = $region12
      $region11: #{tpu_custom_call.1} parent=5 // pred_region
        %s192 = ssub.s32 %s13, 1
        // Predicated region
        $region13: #{tpu_custom_call.1} parent=11 // pred_check
          %p193 = pneg %p125
        $region14: #{tpu_custom_call.1} parent=11 // pred_check_branch
          %195 = sbr.rel (%p193) target = $region16
        $region15: #{tpu_custom_call.1} parent=11 // pred_region
          _
        $region16: #{tpu_custom_call.1} parent=11 // pred_fallthru
          _
        // Predicated region
        $region17: #{tpu_custom_call.1} parent=11 // pred_check
          %p196 = pneg %p146
        $region18: #{tpu_custom_call.1} parent=11 // pred_check_branch
          %198 = sbr.rel (%p196) target = $region20
        $region19: #{tpu_custom_call.1} parent=11 // pred_region
          _
        $region20: #{tpu_custom_call.1} parent=11 // pred_fallthru
          _
      $region12: #{tpu_custom_call.1} parent=5 // pred_fallthru
        _
      %p199 = scmp.lt.s32.totalorder %s13, 8
      // Predicated region
      $region21: #{tpu_custom_call.1} parent=5 // pred_check
        %p200 = pneg %p199
      $region22: #{tpu_custom_call.1} parent=5 // pred_check_branch
        %202 = sbr.rel (%p200) target = $region24
      $region23: #{tpu_custom_call.1} parent=5 // pred_region
        // Predicated region
        $region25: #{tpu_custom_call.1} parent=23 // pred_check
          %p203 = pneg %p64
        $region26: #{tpu_custom_call.1} parent=23 // pred_check_branch
          %205 = sbr.rel (%p203) target = $region28
        $region27: #{tpu_custom_call.1} parent=23 // pred_region
          %s206 = ssub.s32 1, %s20
          %s207 = smul.u32 %s21, %s206
          %s208 = smul.u32 %s20, 3
          %s209 = sadd.s32 %s207, %s208
          %s210 = smul.u32 %s22, %s206
          %s211 = smul.u32 64, %s210
          %p212 = scmp.lt.s32.totalorder %s209, 3
          %s213 = scalar_select %p212, %s209, 3
          %p214 = scmp.lt.s32.totalorder %s211, 63
          %s215 = scalar_select %p214, %s211, 63
          %s216 = smul.addr %s213, 64
          %s217 = sadd.s32 %s215, %s216
          %s218 = smul.addr %s217, 8
          %s219 = scalar_lea.vmem %s0, %s218
          %s220 = ssub.s32 1, %s20
          %s221 = smul.u32 %s21, %s220
          %s222 = smul.u32 %s20, 3
          %s223 = sadd.s32 %s221, %s222
          %s224 = smul.u32 %s22, %s220
          %s225 = smul.u32 64, %s224
        $region28: #{tpu_custom_call.1} parent=23 // pred_fallthru
          _
        // Predicated region
        $region29: #{tpu_custom_call.1} parent=23 // pred_check
          %p226 = pneg %p98
        $region30: #{tpu_custom_call.1} parent=23 // pred_check_branch
          %228 = sbr.rel (%p226) target = $region32
        $region31: #{tpu_custom_call.1} parent=23 // pred_region
          %s229 = ssub.s32 1, %s20
          %s230 = smul.u32 %s21, %s229
          %s231 = smul.u32 %s20, 3
          %s232 = sadd.s32 %s230, %s231
          %p233 = scmp.lt.s32.totalorder %s232, 3
          %s234 = scalar_select %p233, %s232, 3
          %s235 = smul.addr %s234, 2
          %s236 = smul.addr %s235, 8
          %s237 = scalar_lea.vmem %s1, %s236
          %s238 = ssub.s32 1, %s20
          %s239 = smul.u32 %s21, %s238
          %s240 = smul.u32 %s20, 3
          %s241 = sadd.s32 %s239, %s240
        $region32: #{tpu_custom_call.1} parent=23 // pred_fallthru
          _
      $region24: #{tpu_custom_call.1} parent=5 // pred_fallthru
        _
      %p242 = scmp.le.s32.totalorder 1, %s13
      %p243 = scmp.lt.s32.totalorder %s13, 9
      %p244 = pnand %p242, %p243
      %p245 = pneg %p244
      // Predicated region
      $region33: #{tpu_custom_call.1} parent=5 // pred_check
        _
      $region34: #{tpu_custom_call.1} parent=5 // pred_check_branch
        %247 = sbr.rel (%p244) target = $region36
      $region35: #{tpu_custom_call.1} parent=5 // pred_region
        %s248 = ssub.s32 %s13, 1
        %s249 = ssub.s32 1, %s23
        %s250 = smul.u32 %s24, %s249
        %s251 = smul.u32 %s23, 3
        %s252 = sadd.s32 %s250, %s251
        %s253 = smul.u32 %s25, %s249
        %s254 = smul.u32 64, %s253
        %p255 = scmp.lt.s32.totalorder %s252, 3
        %s256 = scalar_select %p255, %s252, 3
        %p257 = scmp.lt.s32.totalorder %s254, 63
        %s258 = scalar_select %p257, %s254, 63
        %s259 = smul.addr %s256, 64
        %s260 = sadd.s32 %s258, %s259
        %s261 = smul.addr %s260, 8
        %s262 = scalar_lea.vmem %s0, %s261
        %p263 = pneg %p70
        %p264 = pneg %p67
        %s265 = ssub.s32 1, %s23
        %s266 = smul.u32 %s24, %s265
        %s267 = smul.u32 %s23, 3
        %s268 = sadd.s32 %s266, %s267
        %p269 = scmp.lt.s32.totalorder %s268, 3
        %s270 = scalar_select %p269, %s268, 3
        %s271 = smul.addr %s270, 2
        %s272 = smul.addr %s271, 8
        %s273 = scalar_lea.vmem %s1, %s272
        %p274 = pneg %p104
        %p275 = pneg %p101
        %p276 = pneg %p125
        %p277 = pneg %p122
        %p278 = pneg %p146
        %p279 = pneg %p143
        %p280 = pneg %p178
        %p281 = pneg %p175
        %s282 = sand.u32 %s165, 1
        %s283 = scalar_lea.sflag [#allocation8], %s282
        %s284 = sand.u32 %s165, 1
        %s285 = smul.addr %s284, 512
        %s286 = scalar_lea.vmem [#allocation7], %s285
        %s287 = ssub.s32 1, %s23
        %s288 = smul.u32 %s24, %s287
        %s289 = smul.u32 %s23, 3
        %s290 = sadd.s32 %s288, %s289
        %s291 = smul.u32 %s25, %s287
        %s292 = smul.u32 64, %s291
        %p293 = scmp.lt.s32.totalorder %s290, 3
        %s294 = scalar_select %p293, %s290, 3
        %p295 = scmp.lt.s32.totalorder %s292, 63
        %s296 = scalar_select %p295, %s292, 63
        %s297 = smul.addr %s294, 64
        %s298 = sadd.s32 %s296, %s297
        %s299 = smul.addr %s298, 8
        %s300 = scalar_lea.vmem %s0, %s299
        %s301 = ssub.s32 1, %s23
        %s302 = smul.u32 %s24, %s301
        %s303 = smul.u32 %s23, 3
        %s304 = sadd.s32 %s302, %s303
        %s305 = smul.u32 %s25, %s301
        %s306 = smul.u32 64, %s305
        %s307 = ssub.s32 1, %s23
        %s308 = smul.u32 %s24, %s307
        %s309 = smul.u32 %s23, 3
        %s310 = sadd.s32 %s308, %s309
        %p311 = scmp.lt.s32.totalorder %s310, 3
        %s312 = scalar_select %p311, %s310, 3
        %s313 = smul.addr %s312, 2
        %s314 = smul.addr %s313, 8
        %s315 = scalar_lea.vmem %s1, %s314
        %s316 = ssub.s32 1, %s23
        %s317 = smul.u32 %s24, %s316
        %s318 = smul.u32 %s23, 3
        %s319 = sadd.s32 %s317, %s318
        %s320 = smul.u32 %s24, %s23
        %s321 = smul.u32 %s25, %s23
        %s322 = smul.u32 64, %s321
        %s323 = sadd.s32 %s24, %s25
        %p324 = scmp.eq.s32.totalorder %s24, 0
        %p325 = scmp.eq.s32.totalorder %s25, 0
        %p326 = pnand %p324, %p325
        %p327 = pneg %p326
        %p328 = scmp.eq.s32.totalorder %s23, 0
        // Predicated region
        $region37: #{tpu_custom_call.1} parent=35 // pred_check
          %p329 = pneg %p328
        $region38: #{tpu_custom_call.1} parent=35 // pred_check_branch
          %331 = sbr.rel (%p329) target = $region40
        $region39: #{tpu_custom_call.1} parent=35 // pred_region
          // Predicated region
          $region41: #{tpu_custom_call.1} parent=39 // pred_check
            _
          $region42: #{tpu_custom_call.1} parent=39 // pred_check_branch
            %333 = sbr.rel (%p326) target = $region44
          $region43: #{tpu_custom_call.1} parent=39 // pred_region
            %334 = vst [vmem:[#allocation3] sm:$0x1] 0.0
            %335 = vst [vmem:[#allocation4] sm:$0x1] 0.0
          $region44: #{tpu_custom_call.1} parent=39 // pred_fallthru
            _
          %v336 = vld [vmem:[%s300] sm:$0xff]
          %v337 = vld [vmem:[%s300 + $0x8] sm:$0xff]
          %v338 = vld [vmem:[%s300 + $0x10] sm:$0xff]
          %v339 = vld [vmem:[%s300 + $0x18] sm:$0xff]
          %v340 = vld [vmem:[%s300 + $0x20] sm:$0xff]
          %v341 = vld [vmem:[%s300 + $0x28] sm:$0xff]
          %v342 = vld [vmem:[%s300 + $0x30] sm:$0xff]
          %v343 = vld [vmem:[%s300 + $0x38] sm:$0xff]
          %v344 = vld [vmem:[%s300 + $0x40] sm:$0xff]
          %v345 = vld [vmem:[%s300 + $0x48] sm:$0xff]
          %v346 = vld [vmem:[%s300 + $0x50] sm:$0xff]
          %v347 = vld [vmem:[%s300 + $0x58] sm:$0xff]
          %v348 = vld [vmem:[%s300 + $0x60] sm:$0xff]
          %v349 = vld [vmem:[%s300 + $0x68] sm:$0xff]
          %v350 = vld [vmem:[%s300 + $0x70] sm:$0xff]
          %v351 = vld [vmem:[%s300 + $0x78] sm:$0xff]
          %v352 = vld [vmem:[%s300 + $0x80] sm:$0xff]
          %v353 = vld [vmem:[%s300 + $0x88] sm:$0xff]
          %v354 = vld [vmem:[%s300 + $0x90] sm:$0xff]
          %v355 = vld [vmem:[%s300 + $0x98] sm:$0xff]
          %v356 = vld [vmem:[%s300 + $0xa0] sm:$0xff]
          %v357 = vld [vmem:[%s300 + $0xa8] sm:$0xff]
          %v358 = vld [vmem:[%s300 + $0xb0] sm:$0xff]
          %v359 = vld [vmem:[%s300 + $0xb8] sm:$0xff]
          %v360 = vld [vmem:[%s300 + $0xc0] sm:$0xff]
          %v361 = vld [vmem:[%s300 + $0xc8] sm:$0xff]
          %v362 = vld [vmem:[%s300 + $0xd0] sm:$0xff]
          %v363 = vld [vmem:[%s300 + $0xd8] sm:$0xff]
          %v364 = vld [vmem:[%s300 + $0xe0] sm:$0xff]
          %v365 = vld [vmem:[%s300 + $0xe8] sm:$0xff]
          %v366 = vld [vmem:[%s300 + $0xf0] sm:$0xff]
          %v367 = vld [vmem:[%s300 + $0xf8] sm:$0xff]
          %v368 = vld [vmem:[%s300 + $0x100] sm:$0xff]
          %v369 = vld [vmem:[%s300 + $0x108] sm:$0xff]
          %v370 = vld [vmem:[%s300 + $0x110] sm:$0xff]
          %v371 = vld [vmem:[%s300 + $0x118] sm:$0xff]
          %v372 = vld [vmem:[%s300 + $0x120] sm:$0xff]
          %v373 = vld [vmem:[%s300 + $0x128] sm:$0xff]
          %v374 = vld [vmem:[%s300 + $0x130] sm:$0xff]
          %v375 = vld [vmem:[%s300 + $0x138] sm:$0xff]
          %v376 = vld [vmem:[%s300 + $0x140] sm:$0xff]
          %v377 = vld [vmem:[%s300 + $0x148] sm:$0xff]
          %v378 = vld [vmem:[%s300 + $0x150] sm:$0xff]
          %v379 = vld [vmem:[%s300 + $0x158] sm:$0xff]
          %v380 = vld [vmem:[%s300 + $0x160] sm:$0xff]
          %v381 = vld [vmem:[%s300 + $0x168] sm:$0xff]
          %v382 = vld [vmem:[%s300 + $0x170] sm:$0xff]
          %v383 = vld [vmem:[%s300 + $0x178] sm:$0xff]
          %v384 = vld [vmem:[%s300 + $0x180] sm:$0xff]
          %v385 = vld [vmem:[%s300 + $0x188] sm:$0xff]
          %v386 = vld [vmem:[%s300 + $0x190] sm:$0xff]
          %v387 = vld [vmem:[%s300 + $0x198] sm:$0xff]
          %v388 = vld [vmem:[%s300 + $0x1a0] sm:$0xff]
          %v389 = vld [vmem:[%s300 + $0x1a8] sm:$0xff]
          %v390 = vld [vmem:[%s300 + $0x1b0] sm:$0xff]
          %v391 = vld [vmem:[%s300 + $0x1b8] sm:$0xff]
          %v392 = vld [vmem:[%s300 + $0x1c0] sm:$0xff]
          %v393 = vld [vmem:[%s300 + $0x1c8] sm:$0xff]
          %v394 = vld [vmem:[%s300 + $0x1d0] sm:$0xff]
          %v395 = vld [vmem:[%s300 + $0x1d8] sm:$0xff]
          %v396 = vld [vmem:[%s300 + $0x1e0] sm:$0xff]
          %v397 = vld [vmem:[%s300 + $0x1e8] sm:$0xff]
          %v398 = vld [vmem:[%s300 + $0x1f0] sm:$0xff]
          %v399 = vld [vmem:[%s300 + $0x1f8] sm:$0xff]
          %v400 = vld [vmem:[%s315] sm:$0xff]
          %v401 = vld [vmem:[%s315 + $0x8] sm:$0xff]
          %vm402 = vcmask 130048
          %v404 = vsel %vm402, %v336, 0
          %v407 = vsel %vm402, %v337, 0
          %v410 = vsel %vm402, %v338, 0
          %v413 = vsel %vm402, %v339, 0
          %v416 = vsel %vm402, %v340, 0
          %v419 = vsel %vm402, %v341, 0
          %v422 = vsel %vm402, %v342, 0
          %v425 = vsel %vm402, %v343, 0
          %v428 = vsel %vm402, %v344, 0
          %v431 = vsel %vm402, %v345, 0
          %v434 = vsel %vm402, %v346, 0
          %v437 = vsel %vm402, %v347, 0
          %v440 = vsel %vm402, %v348, 0
          %v443 = vsel %vm402, %v349, 0
          %v446 = vsel %vm402, %v350, 0
          %v449 = vsel %vm402, %v351, 0
          %v452 = vsel %vm402, %v352, 0
          %v455 = vsel %vm402, %v353, 0
          %v458 = vsel %vm402, %v354, 0
          %v461 = vsel %vm402, %v355, 0
          %v464 = vsel %vm402, %v356, 0
          %v467 = vsel %vm402, %v357, 0
          %v470 = vsel %vm402, %v358, 0
          %v473 = vsel %vm402, %v359, 0
          %v476 = vsel %vm402, %v360, 0
          %v479 = vsel %vm402, %v361, 0
          %v482 = vsel %vm402, %v362, 0
          %v485 = vsel %vm402, %v363, 0
          %v488 = vsel %vm402, %v364, 0
          %v491 = vsel %vm402, %v365, 0
          %v494 = vsel %vm402, %v366, 0
          %v497 = vsel %vm402, %v367, 0
          %v500 = vsel %vm402, %v368, 0
          %v503 = vsel %vm402, %v369, 0
          %v506 = vsel %vm402, %v370, 0
          %v509 = vsel %vm402, %v371, 0
          %v512 = vsel %vm402, %v372, 0
          %v515 = vsel %vm402, %v373, 0
          %v518 = vsel %vm402, %v374, 0
          %v521 = vsel %vm402, %v375, 0
          %v524 = vsel %vm402, %v376, 0
          %v527 = vsel %vm402, %v377, 0
          %v530 = vsel %vm402, %v378, 0
          %v533 = vsel %vm402, %v379, 0
          %v536 = vsel %vm402, %v380, 0
          %v539 = vsel %vm402, %v381, 0
          %v542 = vsel %vm402, %v382, 0
          %v545 = vsel %vm402, %v383, 0
          %v548 = vsel %vm402, %v384, 0
          %v551 = vsel %vm402, %v385, 0
          %v554 = vsel %vm402, %v386, 0
          %v557 = vsel %vm402, %v387, 0
          %v560 = vsel %vm402, %v388, 0
          %v563 = vsel %vm402, %v389, 0
          %v566 = vsel %vm402, %v390, 0
          %v569 = vsel %vm402, %v391, 0
          %v572 = vsel %vm402, %v392, 0
          %v575 = vsel %vm402, %v393, 0
          %v578 = vsel %vm402, %v394, 0
          %v581 = vsel %vm402, %v395, 0
          %v584 = vsel %vm402, %v396, 0
          %v587 = vsel %vm402, %v397, 0
          %v590 = vsel %vm402, %v398, 0
          %v593 = vsel %vm402, %v399, 0
          %595 = vmatpush.msra.mxu0 0.0
          %596 = vmatpush.msra.mxu0 0.0
          %597 = vmatpush.msra.mxu0 0.0
          %598 = vmatpush.msra.mxu0 0.0
          %599 = vmatpush.msra.mxu0 0.0
          %600 = vmatpush.msra.mxu0 0.0
          %601 = vmatpush.msra.mxu0 0.0
          %602 = vmatpush.msra.mxu0 0.0
          %603 = vmatpush.msra.mxu0 0.0
          %604 = vmatpush.msra.mxu0 0.0
          %605 = vmatpush.msra.mxu0 0.0
          %606 = vmatpush.msra.mxu0 0.0
          %607 = vmatpush.msra.mxu0 0.0
          %608 = vmatpush.msra.mxu0 0.0
          %609 = vmatpush.msra.mxu0 %v401
          %610 = vmatpush.msra.mxu0 %v400
          %611 = vmatmul.f32.gmra.mxu0 %v404
          %v612 = vpop.f32.mrf.mxu0
          %v613 = vadd.f32 0.0, %v612
          %614 = vmatmul.f32.gmra.mxu0 %v407
          %v615 = vpop.f32.mrf.mxu0
          %v616 = vadd.f32 0.0, %v615
          %617 = vmatmul.f32.gmra.mxu0 %v410
          %v618 = vpop.f32.mrf.mxu0
          %v619 = vadd.f32 0.0, %v618
          %620 = vmatmul.f32.gmra.mxu0 %v413
          %v621 = vpop.f32.mrf.mxu0
          %v622 = vadd.f32 0.0, %v621
          %623 = vmatmul.f32.gmra.mxu0 %v416
          %v624 = vpop.f32.mrf.mxu0
          %v625 = vadd.f32 0.0, %v624
          %626 = vmatmul.f32.gmra.mxu0 %v419
          %v627 = vpop.f32.mrf.mxu0
          %v628 = vadd.f32 0.0, %v627
          %629 = vmatmul.f32.gmra.mxu0 %v422
          %v630 = vpop.f32.mrf.mxu0
          %v631 = vadd.f32 0.0, %v630
          %632 = vmatmul.f32.gmra.mxu0 %v425
          %v633 = vpop.f32.mrf.mxu0
          %v634 = vadd.f32 0.0, %v633
          %635 = vmatmul.f32.gmra.mxu0 %v428
          %v636 = vpop.f32.mrf.mxu0
          %v637 = vadd.f32 0.0, %v636
          %638 = vmatmul.f32.gmra.mxu0 %v431
          %v639 = vpop.f32.mrf.mxu0
          %v640 = vadd.f32 0.0, %v639
          %641 = vmatmul.f32.gmra.mxu0 %v434
          %v642 = vpop.f32.mrf.mxu0
          %v643 = vadd.f32 0.0, %v642
          %644 = vmatmul.f32.gmra.mxu0 %v437
          %v645 = vpop.f32.mrf.mxu0
          %v646 = vadd.f32 0.0, %v645
          %647 = vmatmul.f32.gmra.mxu0 %v440
          %v648 = vpop.f32.mrf.mxu0
          %v649 = vadd.f32 0.0, %v648
          %650 = vmatmul.f32.gmra.mxu0 %v443
          %v651 = vpop.f32.mrf.mxu0
          %v652 = vadd.f32 0.0, %v651
          %653 = vmatmul.f32.gmra.mxu0 %v446
          %v654 = vpop.f32.mrf.mxu0
          %v655 = vadd.f32 0.0, %v654
          %656 = vmatmul.f32.gmra.mxu0 %v449
          %v657 = vpop.f32.mrf.mxu0
          %v658 = vadd.f32 0.0, %v657
          %659 = vmatmul.f32.gmra.mxu0 %v452
          %v660 = vpop.f32.mrf.mxu0
          %v661 = vadd.f32 0.0, %v660
          %662 = vmatmul.f32.gmra.mxu0 %v455
          %v663 = vpop.f32.mrf.mxu0
          %v664 = vadd.f32 0.0, %v663
          %665 = vmatmul.f32.gmra.mxu0 %v458
          %v666 = vpop.f32.mrf.mxu0
          %v667 = vadd.f32 0.0, %v666
          %668 = vmatmul.f32.gmra.mxu0 %v461
          %v669 = vpop.f32.mrf.mxu0
          %v670 = vadd.f32 0.0, %v669
          %671 = vmatmul.f32.gmra.mxu0 %v464
          %v672 = vpop.f32.mrf.mxu0
          %v673 = vadd.f32 0.0, %v672
          %674 = vmatmul.f32.gmra.mxu0 %v467
          %v675 = vpop.f32.mrf.mxu0
          %v676 = vadd.f32 0.0, %v675
          %677 = vmatmul.f32.gmra.mxu0 %v470
          %v678 = vpop.f32.mrf.mxu0
          %v679 = vadd.f32 0.0, %v678
          %680 = vmatmul.f32.gmra.mxu0 %v473
          %v681 = vpop.f32.mrf.mxu0
          %v682 = vadd.f32 0.0, %v681
          %683 = vmatmul.f32.gmra.mxu0 %v476
          %v684 = vpop.f32.mrf.mxu0
          %v685 = vadd.f32 0.0, %v684
          %686 = vmatmul.f32.gmra.mxu0 %v479
          %v687 = vpop.f32.mrf.mxu0
          %v688 = vadd.f32 0.0, %v687
          %689 = vmatmul.f32.gmra.mxu0 %v482
          %v690 = vpop.f32.mrf.mxu0
          %v691 = vadd.f32 0.0, %v690
          %692 = vmatmul.f32.gmra.mxu0 %v485
          %v693 = vpop.f32.mrf.mxu0
          %v694 = vadd.f32 0.0, %v693
          %695 = vmatmul.f32.gmra.mxu0 %v488
          %v696 = vpop.f32.mrf.mxu0
          %v697 = vadd.f32 0.0, %v696
          %698 = vmatmul.f32.gmra.mxu0 %v491
          %v699 = vpop.f32.mrf.mxu0
          %v700 = vadd.f32 0.0, %v699
          %701 = vmatmul.f32.gmra.mxu0 %v494
          %v702 = vpop.f32.mrf.mxu0
          %v703 = vadd.f32 0.0, %v702
          %704 = vmatmul.f32.gmra.mxu0 %v497
          %v705 = vpop.f32.mrf.mxu0
          %v706 = vadd.f32 0.0, %v705
          %707 = vmatmul.f32.gmra.mxu0 %v500
          %v708 = vpop.f32.mrf.mxu0
          %v709 = vadd.f32 0.0, %v708
          %710 = vmatmul.f32.gmra.mxu0 %v503
          %v711 = vpop.f32.mrf.mxu0
          %v712 = vadd.f32 0.0, %v711
          %713 = vmatmul.f32.gmra.mxu0 %v506
          %v714 = vpop.f32.mrf.mxu0
          %v715 = vadd.f32 0.0, %v714
          %716 = vmatmul.f32.gmra.mxu0 %v509
          %v717 = vpop.f32.mrf.mxu0
          %v718 = vadd.f32 0.0, %v717
          %719 = vmatmul.f32.gmra.mxu0 %v512
          %v720 = vpop.f32.mrf.mxu0
          %v721 = vadd.f32 0.0, %v720
          %722 = vmatmul.f32.gmra.mxu0 %v515
          %v723 = vpop.f32.mrf.mxu0
          %v724 = vadd.f32 0.0, %v723
          %725 = vmatmul.f32.gmra.mxu0 %v518
          %v726 = vpop.f32.mrf.mxu0
          %v727 = vadd.f32 0.0, %v726
          %728 = vmatmul.f32.gmra.mxu0 %v521
          %v729 = vpop.f32.mrf.mxu0
          %v730 = vadd.f32 0.0, %v729
          %731 = vmatmul.f32.gmra.mxu0 %v524
          %v732 = vpop.f32.mrf.mxu0
          %v733 = vadd.f32 0.0, %v732
          %734 = vmatmul.f32.gmra.mxu0 %v527
          %v735 = vpop.f32.mrf.mxu0
          %v736 = vadd.f32 0.0, %v735
          %737 = vmatmul.f32.gmra.mxu0 %v530
          %v738 = vpop.f32.mrf.mxu0
          %v739 = vadd.f32 0.0, %v738
          %740 = vmatmul.f32.gmra.mxu0 %v533
          %v741 = vpop.f32.mrf.mxu0
          %v742 = vadd.f32 0.0, %v741
          %743 = vmatmul.f32.gmra.mxu0 %v536
          %v744 = vpop.f32.mrf.mxu0
          %v745 = vadd.f32 0.0, %v744
          %746 = vmatmul.f32.gmra.mxu0 %v539
          %v747 = vpop.f32.mrf.mxu0
          %v748 = vadd.f32 0.0, %v747
          %749 = vmatmul.f32.gmra.mxu0 %v542
          %v750 = vpop.f32.mrf.mxu0
          %v751 = vadd.f32 0.0, %v750
          %752 = vmatmul.f32.gmra.mxu0 %v545
          %v753 = vpop.f32.mrf.mxu0
          %v754 = vadd.f32 0.0, %v753
          %755 = vmatmul.f32.gmra.mxu0 %v548
          %v756 = vpop.f32.mrf.mxu0
          %v757 = vadd.f32 0.0, %v756
          %758 = vmatmul.f32.gmra.mxu0 %v551
          %v759 = vpop.f32.mrf.mxu0
          %v760 = vadd.f32 0.0, %v759
          %761 = vmatmul.f32.gmra.mxu0 %v554
          %v762 = vpop.f32.mrf.mxu0
          %v763 = vadd.f32 0.0, %v762
          %764 = vmatmul.f32.gmra.mxu0 %v557
          %v765 = vpop.f32.mrf.mxu0
          %v766 = vadd.f32 0.0, %v765
          %767 = vmatmul.f32.gmra.mxu0 %v560
          %v768 = vpop.f32.mrf.mxu0
          %v769 = vadd.f32 0.0, %v768
          %770 = vmatmul.f32.gmra.mxu0 %v563
          %v771 = vpop.f32.mrf.mxu0
          %v772 = vadd.f32 0.0, %v771
          %773 = vmatmul.f32.gmra.mxu0 %v566
          %v774 = vpop.f32.mrf.mxu0
          %v775 = vadd.f32 0.0, %v774
          %776 = vmatmul.f32.gmra.mxu0 %v569
          %v777 = vpop.f32.mrf.mxu0
          %v778 = vadd.f32 0.0, %v777
          %779 = vmatmul.f32.gmra.mxu0 %v572
          %v780 = vpop.f32.mrf.mxu0
          %v781 = vadd.f32 0.0, %v780
          %782 = vmatmul.f32.gmra.mxu0 %v575
          %v783 = vpop.f32.mrf.mxu0
          %v784 = vadd.f32 0.0, %v783
          %785 = vmatmul.f32.gmra.mxu0 %v578
          %v786 = vpop.f32.mrf.mxu0
          %v787 = vadd.f32 0.0, %v786
          %788 = vmatmul.f32.gmra.mxu0 %v581
          %v789 = vpop.f32.mrf.mxu0
          %v790 = vadd.f32 0.0, %v789
          %791 = vmatmul.f32.gmra.mxu0 %v584
          %v792 = vpop.f32.mrf.mxu0
          %v793 = vadd.f32 0.0, %v792
          %794 = vmatmul.f32.gmra.mxu0 %v587
          %v795 = vpop.f32.mrf.mxu0
          %v796 = vadd.f32 0.0, %v795
          %797 = vmatmul.f32.gmra.mxu0 %v590
          %v798 = vpop.f32.mrf.mxu0
          %v799 = vadd.f32 0.0, %v798
          %800 = vmatmul.f32.gmra.mxu0 %v593
          %v801 = vpop.f32.mrf.mxu0
          %v802 = vadd.f32 0.0, %v801
          %803 = vdwg.mxu0
          %s804 = smul.u32 %s323, 512
          %s805 = scalar_lea.vmem [#allocation2], %s804
          %806 = vst [vmem:[%s805] sm:$0xff] %v613
          %807 = vst [vmem:[%s805 + $0x8] sm:$0xff] %v616
          %808 = vst [vmem:[%s805 + $0x10] sm:$0xff] %v619
          %809 = vst [vmem:[%s805 + $0x18] sm:$0xff] %v622
          %810 = vst [vmem:[%s805 + $0x20] sm:$0xff] %v625
          %811 = vst [vmem:[%s805 + $0x28] sm:$0xff] %v628
          %812 = vst [vmem:[%s805 + $0x30] sm:$0xff] %v631
          %813 = vst [vmem:[%s805 + $0x38] sm:$0xff] %v634
          %814 = vst [vmem:[%s805 + $0x40] sm:$0xff] %v637
          %815 = vst [vmem:[%s805 + $0x48] sm:$0xff] %v640
          %816 = vst [vmem:[%s805 + $0x50] sm:$0xff] %v643
          %817 = vst [vmem:[%s805 + $0x58] sm:$0xff] %v646
          %818 = vst [vmem:[%s805 + $0x60] sm:$0xff] %v649
          %819 = vst [vmem:[%s805 + $0x68] sm:$0xff] %v652
          %820 = vst [vmem:[%s805 + $0x70] sm:$0xff] %v655
          %821 = vst [vmem:[%s805 + $0x78] sm:$0xff] %v658
          %822 = vst [vmem:[%s805 + $0x80] sm:$0xff] %v661
          %823 = vst [vmem:[%s805 + $0x88] sm:$0xff] %v664
          %824 = vst [vmem:[%s805 + $0x90] sm:$0xff] %v667
          %825 = vst [vmem:[%s805 + $0x98] sm:$0xff] %v670
          %826 = vst [vmem:[%s805 + $0xa0] sm:$0xff] %v673
          %827 = vst [vmem:[%s805 + $0xa8] sm:$0xff] %v676
          %828 = vst [vmem:[%s805 + $0xb0] sm:$0xff] %v679
          %829 = vst [vmem:[%s805 + $0xb8] sm:$0xff] %v682
          %830 = vst [vmem:[%s805 + $0xc0] sm:$0xff] %v685
          %831 = vst [vmem:[%s805 + $0xc8] sm:$0xff] %v688
          %832 = vst [vmem:[%s805 + $0xd0] sm:$0xff] %v691
          %833 = vst [vmem:[%s805 + $0xd8] sm:$0xff] %v694
          %834 = vst [vmem:[%s805 + $0xe0] sm:$0xff] %v697
          %835 = vst [vmem:[%s805 + $0xe8] sm:$0xff] %v700
          %836 = vst [vmem:[%s805 + $0xf0] sm:$0xff] %v703
          %837 = vst [vmem:[%s805 + $0xf8] sm:$0xff] %v706
          %838 = vst [vmem:[%s805 + $0x100] sm:$0xff] %v709
          %839 = vst [vmem:[%s805 + $0x108] sm:$0xff] %v712
          %840 = vst [vmem:[%s805 + $0x110] sm:$0xff] %v715
          %841 = vst [vmem:[%s805 + $0x118] sm:$0xff] %v718
          %842 = vst [vmem:[%s805 + $0x120] sm:$0xff] %v721
          %843 = vst [vmem:[%s805 + $0x128] sm:$0xff] %v724
          %844 = vst [vmem:[%s805 + $0x130] sm:$0xff] %v727
          %845 = vst [vmem:[%s805 + $0x138] sm:$0xff] %v730
          %846 = vst [vmem:[%s805 + $0x140] sm:$0xff] %v733
          %847 = vst [vmem:[%s805 + $0x148] sm:$0xff] %v736
          %848 = vst [vmem:[%s805 + $0x150] sm:$0xff] %v739
          %849 = vst [vmem:[%s805 + $0x158] sm:$0xff] %v742
          %850 = vst [vmem:[%s805 + $0x160] sm:$0xff] %v745
          %851 = vst [vmem:[%s805 + $0x168] sm:$0xff] %v748
          %852 = vst [vmem:[%s805 + $0x170] sm:$0xff] %v751
          %853 = vst [vmem:[%s805 + $0x178] sm:$0xff] %v754
          %854 = vst [vmem:[%s805 + $0x180] sm:$0xff] %v757
          %855 = vst [vmem:[%s805 + $0x188] sm:$0xff] %v760
          %856 = vst [vmem:[%s805 + $0x190] sm:$0xff] %v763
          %857 = vst [vmem:[%s805 + $0x198] sm:$0xff] %v766
          %858 = vst [vmem:[%s805 + $0x1a0] sm:$0xff] %v769
          %859 = vst [vmem:[%s805 + $0x1a8] sm:$0xff] %v772
          %860 = vst [vmem:[%s805 + $0x1b0] sm:$0xff] %v775
          %861 = vst [vmem:[%s805 + $0x1b8] sm:$0xff] %v778
          %862 = vst [vmem:[%s805 + $0x1c0] sm:$0xff] %v781
          %863 = vst [vmem:[%s805 + $0x1c8] sm:$0xff] %v784
          %864 = vst [vmem:[%s805 + $0x1d0] sm:$0xff] %v787
          %865 = vst [vmem:[%s805 + $0x1d8] sm:$0xff] %v790
          %866 = vst [vmem:[%s805 + $0x1e0] sm:$0xff] %v793
          %867 = vst [vmem:[%s805 + $0x1e8] sm:$0xff] %v796
          %868 = vst [vmem:[%s805 + $0x1f0] sm:$0xff] %v799
          %869 = vst [vmem:[%s805 + $0x1f8] sm:$0xff] %v802
          %v870 = vld [vmem:[#allocation3] sm:$0x1]
          %v871 = vadd.f32 %v613, %v616
          %v872 = vadd.f32 %v871, %v619
          %v873 = vadd.f32 %v872, %v622
          %v874 = vadd.f32 %v873, %v625
          %v875 = vadd.f32 %v874, %v628
          %v876 = vadd.f32 %v875, %v631
          %v877 = vadd.f32 %v876, %v634
          %v878 = vadd.f32 %v877, %v637
          %v879 = vadd.f32 %v878, %v640
          %v880 = vadd.f32 %v879, %v643
          %v881 = vadd.f32 %v880, %v646
          %v882 = vadd.f32 %v881, %v649
          %v883 = vadd.f32 %v882, %v652
          %v884 = vadd.f32 %v883, %v655
          %v885 = vadd.f32 %v884, %v658
          %v886 = vadd.f32 %v885, %v661
          %v887 = vadd.f32 %v886, %v664
          %v888 = vadd.f32 %v887, %v667
          %v889 = vadd.f32 %v888, %v670
          %v890 = vadd.f32 %v889, %v673
          %v891 = vadd.f32 %v890, %v676
          %v892 = vadd.f32 %v891, %v679
          %v893 = vadd.f32 %v892, %v682
          %v894 = vadd.f32 %v893, %v685
          %v895 = vadd.f32 %v894, %v688
          %v896 = vadd.f32 %v895, %v691
          %v897 = vadd.f32 %v896, %v694
          %v898 = vadd.f32 %v897, %v697
          %v899 = vadd.f32 %v898, %v700
          %v900 = vadd.f32 %v899, %v703
          %v901 = vadd.f32 %v900, %v706
          %v902 = vadd.f32 %v901, %v709
          %v903 = vadd.f32 %v902, %v712
          %v904 = vadd.f32 %v903, %v715
          %v905 = vadd.f32 %v904, %v718
          %v906 = vadd.f32 %v905, %v721
          %v907 = vadd.f32 %v906, %v724
          %v908 = vadd.f32 %v907, %v727
          %v909 = vadd.f32 %v908, %v730
          %v910 = vadd.f32 %v909, %v733
          %v911 = vadd.f32 %v910, %v736
          %v912 = vadd.f32 %v911, %v739
          %v913 = vadd.f32 %v912, %v742
          %v914 = vadd.f32 %v913, %v745
          %v915 = vadd.f32 %v914, %v748
          %v916 = vadd.f32 %v915, %v751
          %v917 = vadd.f32 %v916, %v754
          %v918 = vadd.f32 %v917, %v757
          %v919 = vadd.f32 %v918, %v760
          %v920 = vadd.f32 %v919, %v763
          %v921 = vadd.f32 %v920, %v766
          %v922 = vadd.f32 %v921, %v769
          %v923 = vadd.f32 %v922, %v772
          %v924 = vadd.f32 %v923, %v775
          %v925 = vadd.f32 %v924, %v778
          %v926 = vadd.f32 %v925, %v781
          %v927 = vadd.f32 %v926, %v784
          %v928 = vadd.f32 %v927, %v787
          %v929 = vadd.f32 %v928, %v790
          %v930 = vadd.f32 %v929, %v793
          %v931 = vadd.f32 %v930, %v796
          %v932 = vadd.f32 %v931, %v799
          %v933 = vadd.f32 %v932, %v802
          %v934 = vrot.slane %v933, 4
          %v935 = vadd.f32 %v933, %v934
          %v936 = vrot.slane %v935, 2
          %v937 = vadd.f32 %v935, %v936
          %v938 = vrot.slane %v937, 1
          %v939 = vadd.f32 %v937, %v938
          %v940 = vadd.f32 %v870, %v939
          %941 = vst [vmem:[#allocation3] sm:$0x1] %v940
          %v942 = vld [vmem:[#allocation4] sm:$0x1]
          %v943 = vmul.f32 %v613, %v613
          %v944 = vmul.f32 %v616, %v616
          %v945 = vmul.f32 %v619, %v619
          %v946 = vmul.f32 %v622, %v622
          %v947 = vmul.f32 %v625, %v625
          %v948 = vmul.f32 %v628, %v628
          %v949 = vmul.f32 %v631, %v631
          %v950 = vmul.f32 %v634, %v634
          %v951 = vmul.f32 %v637, %v637
          %v952 = vmul.f32 %v640, %v640
          %v953 = vmul.f32 %v643, %v643
          %v954 = vmul.f32 %v646, %v646
          %v955 = vmul.f32 %v649, %v649
          %v956 = vmul.f32 %v652, %v652
          %v957 = vmul.f32 %v655, %v655
          %v958 = vmul.f32 %v658, %v658
          %v959 = vmul.f32 %v661, %v661
          %v960 = vmul.f32 %v664, %v664
          %v961 = vmul.f32 %v667, %v667
          %v962 = vmul.f32 %v670, %v670
          %v963 = vmul.f32 %v673, %v673
          %v964 = vmul.f32 %v676, %v676
          %v965 = vmul.f32 %v679, %v679
          %v966 = vmul.f32 %v682, %v682
          %v967 = vmul.f32 %v685, %v685
          %v968 = vmul.f32 %v688, %v688
          %v969 = vmul.f32 %v691, %v691
          %v970 = vmul.f32 %v694, %v694
          %v971 = vmul.f32 %v697, %v697
          %v972 = vmul.f32 %v700, %v700
          %v973 = vmul.f32 %v703, %v703
          %v974 = vmul.f32 %v706, %v706
          %v975 = vmul.f32 %v709, %v709
          %v976 = vmul.f32 %v712, %v712
          %v977 = vmul.f32 %v715, %v715
          %v978 = vmul.f32 %v718, %v718
          %v979 = vmul.f32 %v721, %v721
          %v980 = vmul.f32 %v724, %v724
          %v981 = vmul.f32 %v727, %v727
          %v982 = vmul.f32 %v730, %v730
          %v983 = vmul.f32 %v733, %v733
          %v984 = vmul.f32 %v736, %v736
          %v985 = vmul.f32 %v739, %v739
          %v986 = vmul.f32 %v742, %v742
          %v987 = vmul.f32 %v745, %v745
          %v988 = vmul.f32 %v748, %v748
          %v989 = vmul.f32 %v751, %v751
          %v990 = vmul.f32 %v754, %v754
          %v991 = vmul.f32 %v757, %v757
          %v992 = vmul.f32 %v760, %v760
          %v993 = vmul.f32 %v763, %v763
          %v994 = vmul.f32 %v766, %v766
          %v995 = vmul.f32 %v769, %v769
          %v996 = vmul.f32 %v772, %v772
          %v997 = vmul.f32 %v775, %v775
          %v998 = vmul.f32 %v778, %v778
          %v999 = vmul.f32 %v781, %v781
          %v1000 = vmul.f32 %v784, %v784
          %v1001 = vmul.f32 %v787, %v787
          %v1002 = vmul.f32 %v790, %v790
          %v1003 = vmul.f32 %v793, %v793
          %v1004 = vmul.f32 %v796, %v796
          %v1005 = vmul.f32 %v799, %v799
          %v1006 = vmul.f32 %v802, %v802
          %v1007 = vadd.f32 %v943, %v944
          %v1008 = vadd.f32 %v1007, %v945
          %v1009 = vadd.f32 %v1008, %v946
          %v1010 = vadd.f32 %v1009, %v947
          %v1011 = vadd.f32 %v1010, %v948
          %v1012 = vadd.f32 %v1011, %v949
          %v1013 = vadd.f32 %v1012, %v950
          %v1014 = vadd.f32 %v1013, %v951
          %v1015 = vadd.f32 %v1014, %v952
          %v1016 = vadd.f32 %v1015, %v953
          %v1017 = vadd.f32 %v1016, %v954
          %v1018 = vadd.f32 %v1017, %v955
          %v1019 = vadd.f32 %v1018, %v956
          %v1020 = vadd.f32 %v1019, %v957
          %v1021 = vadd.f32 %v1020, %v958
          %v1022 = vadd.f32 %v1021, %v959
          %v1023 = vadd.f32 %v1022, %v960
          %v1024 = vadd.f32 %v1023, %v961
          %v1025 = vadd.f32 %v1024, %v962
          %v1026 = vadd.f32 %v1025, %v963
          %v1027 = vadd.f32 %v1026, %v964
          %v1028 = vadd.f32 %v1027, %v965
          %v1029 = vadd.f32 %v1028, %v966
          %v1030 = vadd.f32 %v1029, %v967
          %v1031 = vadd.f32 %v1030, %v968
          %v1032 = vadd.f32 %v1031, %v969
          %v1033 = vadd.f32 %v1032, %v970
          %v1034 = vadd.f32 %v1033, %v971
          %v1035 = vadd.f32 %v1034, %v972
          %v1036 = vadd.f32 %v1035, %v973
          %v1037 = vadd.f32 %v1036, %v974
          %v1038 = vadd.f32 %v1037, %v975
          %v1039 = vadd.f32 %v1038, %v976
          %v1040 = vadd.f32 %v1039, %v977
          %v1041 = vadd.f32 %v1040, %v978
          %v1042 = vadd.f32 %v1041, %v979
          %v1043 = vadd.f32 %v1042, %v980
          %v1044 = vadd.f32 %v1043, %v981
          %v1045 = vadd.f32 %v1044, %v982
          %v1046 = vadd.f32 %v1045, %v983
          %v1047 = vadd.f32 %v1046, %v984
          %v1048 = vadd.f32 %v1047, %v985
          %v1049 = vadd.f32 %v1048, %v986
          %v1050 = vadd.f32 %v1049, %v987
          %v1051 = vadd.f32 %v1050, %v988
          %v1052 = vadd.f32 %v1051, %v989
          %v1053 = vadd.f32 %v1052, %v990
          %v1054 = vadd.f32 %v1053, %v991
          %v1055 = vadd.f32 %v1054, %v992
          %v1056 = vadd.f32 %v1055, %v993
          %v1057 = vadd.f32 %v1056, %v994
          %v1058 = vadd.f32 %v1057, %v995
          %v1059 = vadd.f32 %v1058, %v996
          %v1060 = vadd.f32 %v1059, %v997
          %v1061 = vadd.f32 %v1060, %v998
          %v1062 = vadd.f32 %v1061, %v999
          %v1063 = vadd.f32 %v1062, %v1000
          %v1064 = vadd.f32 %v1063, %v1001
          %v1065 = vadd.f32 %v1064, %v1002
          %v1066 = vadd.f32 %v1065, %v1003
          %v1067 = vadd.f32 %v1066, %v1004
          %v1068 = vadd.f32 %v1067, %v1005
          %v1069 = vadd.f32 %v1068, %v1006
          %v1070 = vrot.slane %v1069, 4
          %v1071 = vadd.f32 %v1069, %v1070
          %v1072 = vrot.slane %v1071, 2
          %v1073 = vadd.f32 %v1071, %v1072
          %v1074 = vrot.slane %v1073, 1
          %v1075 = vadd.f32 %v1073, %v1074
          %v1076 = vadd.f32 %v942, %v1075
          %1077 = vst [vmem:[#allocation4] sm:$0x1] %v1076
        $region40: #{tpu_custom_call.1} parent=35 // pred_fallthru
          _
        %p1078 = scmp.eq.s32.totalorder %s23, 1
        // Predicated region
        $region45: #{tpu_custom_call.1} parent=35 // pred_check
          %p1079 = pneg %p1078
        $region46: #{tpu_custom_call.1} parent=35 // pred_check_branch
          %1081 = sbr.rel (%p1079) target = $region48
        $region47: #{tpu_custom_call.1} parent=35 // pred_region
          // Predicated region
          $region49: #{tpu_custom_call.1} parent=47 // pred_check
            _
          $region50: #{tpu_custom_call.1} parent=47 // pred_check_branch
            %1083 = sbr.rel (%p326) target = $region52
          $region51: #{tpu_custom_call.1} parent=47 // pred_region
            %v1084 = vld [vmem:[#allocation3] sm:$0x1]
            %v1085 = vmul.f32 %v1084, 0.00048828125
            %v1086 = vld [vmem:[#allocation4] sm:$0x1]
            %v1087 = vmul.f32 %v1086, 0.00048828125
            %v1088 = vmul.f32 %v1085, %v1085
            %v1089 = vsub.f32 %v1087, %v1088
            %v1090 = vld [vmem:[%s2] sm:$0x1]
            %v1091 = vadd.f32 %v1089, 1e-05
            %v1092 = vrsqrt.pop %v1091
            %v1093 = vmul.f32 %v1092, %v1091
            %v1094 = vmul.f32 %v1093, %v1092
            %v1095 = vmul.f32 0.5, %v1094
            %v1096 = vsub.f32 1.5, %v1095
            %v1097 = vmul.f32 %v1092, %v1096
            %vm1098 = vweird.f32 %v1091
            %vm1099 = vweird.f32 %v1092
            %vm1100 = vmor %vm1098, %vm1099
            %v1101 = vsel %vm1100, %v1092, %v1097
            %v1102 = vmul.f32 %v1090, %v1101
            %1103 = vst [vmem:[#allocation5] sm:$0x1] %v1102
            %v1104 = vld [vmem:[%s3] sm:$0x1]
            %v1105 = vmul.f32 %v1085, %v1102
            %v1106 = vsub.f32 %v1104, %v1105
            %1107 = vst [vmem:[#allocation6] sm:$0x1] %v1106
          $region52: #{tpu_custom_call.1} parent=47 // pred_fallthru
            _
          %s1108 = smul.u32 %s323, 512
          %s1109 = scalar_lea.vmem [#allocation2], %s1108
          %v1110 = vld [vmem:[%s1109] sm:$0xff]
          %v1111 = vld [vmem:[%s1109 + $0x8] sm:$0xff]
          %v1112 = vld [vmem:[%s1109 + $0x10] sm:$0xff]
          %v1113 = vld [vmem:[%s1109 + $0x18] sm:$0xff]
          %v1114 = vld [vmem:[%s1109 + $0x20] sm:$0xff]
          %v1115 = vld [vmem:[%s1109 + $0x28] sm:$0xff]
          %v1116 = vld [vmem:[%s1109 + $0x30] sm:$0xff]
          %v1117 = vld [vmem:[%s1109 + $0x38] sm:$0xff]
          %v1118 = vld [vmem:[%s1109 + $0x40] sm:$0xff]
          %v1119 = vld [vmem:[%s1109 + $0x48] sm:$0xff]
          %v1120 = vld [vmem:[%s1109 + $0x50] sm:$0xff]
          %v1121 = vld [vmem:[%s1109 + $0x58] sm:$0xff]
          %v1122 = vld [vmem:[%s1109 + $0x60] sm:$0xff]
          %v1123 = vld [vmem:[%s1109 + $0x68] sm:$0xff]
          %v1124 = vld [vmem:[%s1109 + $0x70] sm:$0xff]
          %v1125 = vld [vmem:[%s1109 + $0x78] sm:$0xff]
          %v1126 = vld [vmem:[%s1109 + $0x80] sm:$0xff]
          %v1127 = vld [vmem:[%s1109 + $0x88] sm:$0xff]
          %v1128 = vld [vmem:[%s1109 + $0x90] sm:$0xff]
          %v1129 = vld [vmem:[%s1109 + $0x98] sm:$0xff]
          %v1130 = vld [vmem:[%s1109 + $0xa0] sm:$0xff]
          %v1131 = vld [vmem:[%s1109 + $0xa8] sm:$0xff]
          %v1132 = vld [vmem:[%s1109 + $0xb0] sm:$0xff]
          %v1133 = vld [vmem:[%s1109 + $0xb8] sm:$0xff]
          %v1134 = vld [vmem:[%s1109 + $0xc0] sm:$0xff]
          %v1135 = vld [vmem:[%s1109 + $0xc8] sm:$0xff]
          %v1136 = vld [vmem:[%s1109 + $0xd0] sm:$0xff]
          %v1137 = vld [vmem:[%s1109 + $0xd8] sm:$0xff]
          %v1138 = vld [vmem:[%s1109 + $0xe0] sm:$0xff]
          %v1139 = vld [vmem:[%s1109 + $0xe8] sm:$0xff]
          %v1140 = vld [vmem:[%s1109 + $0xf0] sm:$0xff]
          %v1141 = vld [vmem:[%s1109 + $0xf8] sm:$0xff]
          %v1142 = vld [vmem:[%s1109 + $0x100] sm:$0xff]
          %v1143 = vld [vmem:[%s1109 + $0x108] sm:$0xff]
          %v1144 = vld [vmem:[%s1109 + $0x110] sm:$0xff]
          %v1145 = vld [vmem:[%s1109 + $0x118] sm:$0xff]
          %v1146 = vld [vmem:[%s1109 + $0x120] sm:$0xff]
          %v1147 = vld [vmem:[%s1109 + $0x128] sm:$0xff]
          %v1148 = vld [vmem:[%s1109 + $0x130] sm:$0xff]
          %v1149 = vld [vmem:[%s1109 + $0x138] sm:$0xff]
          %v1150 = vld [vmem:[%s1109 + $0x140] sm:$0xff]
          %v1151 = vld [vmem:[%s1109 + $0x148] sm:$0xff]
          %v1152 = vld [vmem:[%s1109 + $0x150] sm:$0xff]
          %v1153 = vld [vmem:[%s1109 + $0x158] sm:$0xff]
          %v1154 = vld [vmem:[%s1109 + $0x160] sm:$0xff]
          %v1155 = vld [vmem:[%s1109 + $0x168] sm:$0xff]
          %v1156 = vld [vmem:[%s1109 + $0x170] sm:$0xff]
          %v1157 = vld [vmem:[%s1109 + $0x178] sm:$0xff]
          %v1158 = vld [vmem:[%s1109 + $0x180] sm:$0xff]
          %v1159 = vld [vmem:[%s1109 + $0x188] sm:$0xff]
          %v1160 = vld [vmem:[%s1109 + $0x190] sm:$0xff]
          %v1161 = vld [vmem:[%s1109 + $0x198] sm:$0xff]
          %v1162 = vld [vmem:[%s1109 + $0x1a0] sm:$0xff]
          %v1163 = vld [vmem:[%s1109 + $0x1a8] sm:$0xff]
          %v1164 = vld [vmem:[%s1109 + $0x1b0] sm:$0xff]
          %v1165 = vld [vmem:[%s1109 + $0x1b8] sm:$0xff]
          %v1166 = vld [vmem:[%s1109 + $0x1c0] sm:$0xff]
          %v1167 = vld [vmem:[%s1109 + $0x1c8] sm:$0xff]
          %v1168 = vld [vmem:[%s1109 + $0x1d0] sm:$0xff]
          %v1169 = vld [vmem:[%s1109 + $0x1d8] sm:$0xff]
          %v1170 = vld [vmem:[%s1109 + $0x1e0] sm:$0xff]
          %v1171 = vld [vmem:[%s1109 + $0x1e8] sm:$0xff]
          %v1172 = vld [vmem:[%s1109 + $0x1f0] sm:$0xff]
          %v1173 = vld [vmem:[%s1109 + $0x1f8] sm:$0xff]
          %v1174 = vld [vmem:[#allocation5] sm:$0x1]
          %v1176 = vperm.slane %v1174, 0
          %v1178 = vmul.f32 %v1110, %v1176
          %v1179 = vmul.f32 %v1111, %v1176
          %v1180 = vmul.f32 %v1112, %v1176
          %v1181 = vmul.f32 %v1113, %v1176
          %v1182 = vmul.f32 %v1114, %v1176
          %v1183 = vmul.f32 %v1115, %v1176
          %v1184 = vmul.f32 %v1116, %v1176
          %v1185 = vmul.f32 %v1117, %v1176
          %v1186 = vmul.f32 %v1118, %v1176
          %v1187 = vmul.f32 %v1119, %v1176
          %v1188 = vmul.f32 %v1120, %v1176
          %v1189 = vmul.f32 %v1121, %v1176
          %v1190 = vmul.f32 %v1122, %v1176
          %v1191 = vmul.f32 %v1123, %v1176
          %v1192 = vmul.f32 %v1124, %v1176
          %v1193 = vmul.f32 %v1125, %v1176
          %v1194 = vmul.f32 %v1126, %v1176
          %v1195 = vmul.f32 %v1127, %v1176
          %v1196 = vmul.f32 %v1128, %v1176
          %v1197 = vmul.f32 %v1129, %v1176
          %v1198 = vmul.f32 %v1130, %v1176
          %v1199 = vmul.f32 %v1131, %v1176
          %v1200 = vmul.f32 %v1132, %v1176
          %v1201 = vmul.f32 %v1133, %v1176
          %v1202 = vmul.f32 %v1134, %v1176
          %v1203 = vmul.f32 %v1135, %v1176
          %v1204 = vmul.f32 %v1136, %v1176
          %v1205 = vmul.f32 %v1137, %v1176
          %v1206 = vmul.f32 %v1138, %v1176
          %v1207 = vmul.f32 %v1139, %v1176
          %v1208 = vmul.f32 %v1140, %v1176
          %v1209 = vmul.f32 %v1141, %v1176
          %v1210 = vmul.f32 %v1142, %v1176
          %v1211 = vmul.f32 %v1143, %v1176
          %v1212 = vmul.f32 %v1144, %v1176
          %v1213 = vmul.f32 %v1145, %v1176
          %v1214 = vmul.f32 %v1146, %v1176
          %v1215 = vmul.f32 %v1147, %v1176
          %v1216 = vmul.f32 %v1148, %v1176
          %v1217 = vmul.f32 %v1149, %v1176
          %v1218 = vmul.f32 %v1150, %v1176
          %v1219 = vmul.f32 %v1151, %v1176
          %v1220 = vmul.f32 %v1152, %v1176
          %v1221 = vmul.f32 %v1153, %v1176
          %v1222 = vmul.f32 %v1154, %v1176
          %v1223 = vmul.f32 %v1155, %v1176
          %v1224 = vmul.f32 %v1156, %v1176
          %v1225 = vmul.f32 %v1157, %v1176
          %v1226 = vmul.f32 %v1158, %v1176
          %v1227 = vmul.f32 %v1159, %v1176
          %v1228 = vmul.f32 %v1160, %v1176
          %v1229 = vmul.f32 %v1161, %v1176
          %v1230 = vmul.f32 %v1162, %v1176
          %v1231 = vmul.f32 %v1163, %v1176
          %v1232 = vmul.f32 %v1164, %v1176
          %v1233 = vmul.f32 %v1165, %v1176
          %v1234 = vmul.f32 %v1166, %v1176
          %v1235 = vmul.f32 %v1167, %v1176
          %v1236 = vmul.f32 %v1168, %v1176
          %v1237 = vmul.f32 %v1169, %v1176
          %v1238 = vmul.f32 %v1170, %v1176
          %v1239 = vmul.f32 %v1171, %v1176
          %v1240 = vmul.f32 %v1172, %v1176
          %v1241 = vmul.f32 %v1173, %v1176
          %v1242 = vld [vmem:[#allocation6] sm:$0x1]
          %v1244 = vperm.slane %v1242, 0
          %v1246 = vadd.f32 %v1178, %v1244
          %v1247 = vadd.f32 %v1179, %v1244
          %v1248 = vadd.f32 %v1180, %v1244
          %v1249 = vadd.f32 %v1181, %v1244
          %v1250 = vadd.f32 %v1182, %v1244
          %v1251 = vadd.f32 %v1183, %v1244
          %v1252 = vadd.f32 %v1184, %v1244
          %v1253 = vadd.f32 %v1185, %v1244
          %v1254 = vadd.f32 %v1186, %v1244
          %v1255 = vadd.f32 %v1187, %v1244
          %v1256 = vadd.f32 %v1188, %v1244
          %v1257 = vadd.f32 %v1189, %v1244
          %v1258 = vadd.f32 %v1190, %v1244
          %v1259 = vadd.f32 %v1191, %v1244
          %v1260 = vadd.f32 %v1192, %v1244
          %v1261 = vadd.f32 %v1193, %v1244
          %v1262 = vadd.f32 %v1194, %v1244
          %v1263 = vadd.f32 %v1195, %v1244
          %v1264 = vadd.f32 %v1196, %v1244
          %v1265 = vadd.f32 %v1197, %v1244
          %v1266 = vadd.f32 %v1198, %v1244
          %v1267 = vadd.f32 %v1199, %v1244
          %v1268 = vadd.f32 %v1200, %v1244
          %v1269 = vadd.f32 %v1201, %v1244
          %v1270 = vadd.f32 %v1202, %v1244
          %v1271 = vadd.f32 %v1203, %v1244
          %v1272 = vadd.f32 %v1204, %v1244
          %v1273 = vadd.f32 %v1205, %v1244
          %v1274 = vadd.f32 %v1206, %v1244
          %v1275 = vadd.f32 %v1207, %v1244
          %v1276 = vadd.f32 %v1208, %v1244
          %v1277 = vadd.f32 %v1209, %v1244
          %v1278 = vadd.f32 %v1210, %v1244
          %v1279 = vadd.f32 %v1211, %v1244
          %v1280 = vadd.f32 %v1212, %v1244
          %v1281 = vadd.f32 %v1213, %v1244
          %v1282 = vadd.f32 %v1214, %v1244
          %v1283 = vadd.f32 %v1215, %v1244
          %v1284 = vadd.f32 %v1216, %v1244
          %v1285 = vadd.f32 %v1217, %v1244
          %v1286 = vadd.f32 %v1218, %v1244
          %v1287 = vadd.f32 %v1219, %v1244
          %v1288 = vadd.f32 %v1220, %v1244
          %v1289 = vadd.f32 %v1221, %v1244
          %v1290 = vadd.f32 %v1222, %v1244
          %v1291 = vadd.f32 %v1223, %v1244
          %v1292 = vadd.f32 %v1224, %v1244
          %v1293 = vadd.f32 %v1225, %v1244
          %v1294 = vadd.f32 %v1226, %v1244
          %v1295 = vadd.f32 %v1227, %v1244
          %v1296 = vadd.f32 %v1228, %v1244
          %v1297 = vadd.f32 %v1229, %v1244
          %v1298 = vadd.f32 %v1230, %v1244
          %v1299 = vadd.f32 %v1231, %v1244
          %v1300 = vadd.f32 %v1232, %v1244
          %v1301 = vadd.f32 %v1233, %v1244
          %v1302 = vadd.f32 %v1234, %v1244
          %v1303 = vadd.f32 %v1235, %v1244
          %v1304 = vadd.f32 %v1236, %v1244
          %v1305 = vadd.f32 %v1237, %v1244
          %v1306 = vadd.f32 %v1238, %v1244
          %v1307 = vadd.f32 %v1239, %v1244
          %v1308 = vadd.f32 %v1240, %v1244
          %v1309 = vadd.f32 %v1241, %v1244
          %v1310 = vtanh.pop %v1246
          %v1311 = vtanh.pop %v1247
          %v1312 = vtanh.pop %v1248
          %v1313 = vtanh.pop %v1249
          %v1314 = vtanh.pop %v1250
          %v1315 = vtanh.pop %v1251
          %v1316 = vtanh.pop %v1252
          %v1317 = vtanh.pop %v1253
          %v1318 = vtanh.pop %v1254
          %v1319 = vtanh.pop %v1255
          %v1320 = vtanh.pop %v1256
          %v1321 = vtanh.pop %v1257
          %v1322 = vtanh.pop %v1258
          %v1323 = vtanh.pop %v1259
          %v1324 = vtanh.pop %v1260
          %v1325 = vtanh.pop %v1261
          %v1326 = vtanh.pop %v1262
          %v1327 = vtanh.pop %v1263
          %v1328 = vtanh.pop %v1264
          %v1329 = vtanh.pop %v1265
          %v1330 = vtanh.pop %v1266
          %v1331 = vtanh.pop %v1267
          %v1332 = vtanh.pop %v1268
          %v1333 = vtanh.pop %v1269
          %v1334 = vtanh.pop %v1270
          %v1335 = vtanh.pop %v1271
          %v1336 = vtanh.pop %v1272
          %v1337 = vtanh.pop %v1273
          %v1338 = vtanh.pop %v1274
          %v1339 = vtanh.pop %v1275
          %v1340 = vtanh.pop %v1276
          %v1341 = vtanh.pop %v1277
          %v1342 = vtanh.pop %v1278
          %v1343 = vtanh.pop %v1279
          %v1344 = vtanh.pop %v1280
          %v1345 = vtanh.pop %v1281
          %v1346 = vtanh.pop %v1282
          %v1347 = vtanh.pop %v1283
          %v1348 = vtanh.pop %v1284
          %v1349 = vtanh.pop %v1285
          %v1350 = vtanh.pop %v1286
          %v1351 = vtanh.pop %v1287
          %v1352 = vtanh.pop %v1288
          %v1353 = vtanh.pop %v1289
          %v1354 = vtanh.pop %v1290
          %v1355 = vtanh.pop %v1291
          %v1356 = vtanh.pop %v1292
          %v1357 = vtanh.pop %v1293
          %v1358 = vtanh.pop %v1294
          %v1359 = vtanh.pop %v1295
          %v1360 = vtanh.pop %v1296
          %v1361 = vtanh.pop %v1297
          %v1362 = vtanh.pop %v1298
          %v1363 = vtanh.pop %v1299
          %v1364 = vtanh.pop %v1300
          %v1365 = vtanh.pop %v1301
          %v1366 = vtanh.pop %v1302
          %v1367 = vtanh.pop %v1303
          %v1368 = vtanh.pop %v1304
          %v1369 = vtanh.pop %v1305
          %v1370 = vtanh.pop %v1306
          %v1371 = vtanh.pop %v1307
          %v1372 = vtanh.pop %v1308
          %v1373 = vtanh.pop %v1309
          %1374 = vst [vmem:[%s286] sm:$0xff] %v1310
          %1375 = vst [vmem:[%s286 + $0x8] sm:$0xff] %v1311
          %1376 = vst [vmem:[%s286 + $0x10] sm:$0xff] %v1312
          %1377 = vst [vmem:[%s286 + $0x18] sm:$0xff] %v1313
          %1378 = vst [vmem:[%s286 + $0x20] sm:$0xff] %v1314
          %1379 = vst [vmem:[%s286 + $0x28] sm:$0xff] %v1315
          %1380 = vst [vmem:[%s286 + $0x30] sm:$0xff] %v1316
          %1381 = vst [vmem:[%s286 + $0x38] sm:$0xff] %v1317
          %1382 = vst [vmem:[%s286 + $0x40] sm:$0xff] %v1318
          %1383 = vst [vmem:[%s286 + $0x48] sm:$0xff] %v1319
          %1384 = vst [vmem:[%s286 + $0x50] sm:$0xff] %v1320
          %1385 = vst [vmem:[%s286 + $0x58] sm:$0xff] %v1321
          %1386 = vst [vmem:[%s286 + $0x60] sm:$0xff] %v1322
          %1387 = vst [vmem:[%s286 + $0x68] sm:$0xff] %v1323
          %1388 = vst [vmem:[%s286 + $0x70] sm:$0xff] %v1324
          %1389 = vst [vmem:[%s286 + $0x78] sm:$0xff] %v1325
          %1390 = vst [vmem:[%s286 + $0x80] sm:$0xff] %v1326
          %1391 = vst [vmem:[%s286 + $0x88] sm:$0xff] %v1327
          %1392 = vst [vmem:[%s286 + $0x90] sm:$0xff] %v1328
          %1393 = vst [vmem:[%s286 + $0x98] sm:$0xff] %v1329
          %1394 = vst [vmem:[%s286 + $0xa0] sm:$0xff] %v1330
          %1395 = vst [vmem:[%s286 + $0xa8] sm:$0xff] %v1331
          %1396 = vst [vmem:[%s286 + $0xb0] sm:$0xff] %v1332
          %1397 = vst [vmem:[%s286 + $0xb8] sm:$0xff] %v1333
          %1398 = vst [vmem:[%s286 + $0xc0] sm:$0xff] %v1334
          %1399 = vst [vmem:[%s286 + $0xc8] sm:$0xff] %v1335
          %1400 = vst [vmem:[%s286 + $0xd0] sm:$0xff] %v1336
          %1401 = vst [vmem:[%s286 + $0xd8] sm:$0xff] %v1337
          %1402 = vst [vmem:[%s286 + $0xe0] sm:$0xff] %v1338
          %1403 = vst [vmem:[%s286 + $0xe8] sm:$0xff] %v1339
          %1404 = vst [vmem:[%s286 + $0xf0] sm:$0xff] %v1340
          %1405 = vst [vmem:[%s286 + $0xf8] sm:$0xff] %v1341
          %1406 = vst [vmem:[%s286 + $0x100] sm:$0xff] %v1342
          %1407 = vst [vmem:[%s286 + $0x108] sm:$0xff] %v1343
          %1408 = vst [vmem:[%s286 + $0x110] sm:$0xff] %v1344
          %1409 = vst [vmem:[%s286 + $0x118] sm:$0xff] %v1345
          %1410 = vst [vmem:[%s286 + $0x120] sm:$0xff] %v1346
          %1411 = vst [vmem:[%s286 + $0x128] sm:$0xff] %v1347
          %1412 = vst [vmem:[%s286 + $0x130] sm:$0xff] %v1348
          %1413 = vst [vmem:[%s286 + $0x138] sm:$0xff] %v1349
          %1414 = vst [vmem:[%s286 + $0x140] sm:$0xff] %v1350
          %1415 = vst [vmem:[%s286 + $0x148] sm:$0xff] %v1351
          %1416 = vst [vmem:[%s286 + $0x150] sm:$0xff] %v1352
          %1417 = vst [vmem:[%s286 + $0x158] sm:$0xff] %v1353
          %1418 = vst [vmem:[%s286 + $0x160] sm:$0xff] %v1354
          %1419 = vst [vmem:[%s286 + $0x168] sm:$0xff] %v1355
          %1420 = vst [vmem:[%s286 + $0x170] sm:$0xff] %v1356
          %1421 = vst [vmem:[%s286 + $0x178] sm:$0xff] %v1357
          %1422 = vst [vmem:[%s286 + $0x180] sm:$0xff] %v1358
          %1423 = vst [vmem:[%s286 + $0x188] sm:$0xff] %v1359
          %1424 = vst [vmem:[%s286 + $0x190] sm:$0xff] %v1360
          %1425 = vst [vmem:[%s286 + $0x198] sm:$0xff] %v1361
          %1426 = vst [vmem:[%s286 + $0x1a0] sm:$0xff] %v1362
          %1427 = vst [vmem:[%s286 + $0x1a8] sm:$0xff] %v1363
          %1428 = vst [vmem:[%s286 + $0x1b0] sm:$0xff] %v1364
          %1429 = vst [vmem:[%s286 + $0x1b8] sm:$0xff] %v1365
          %1430 = vst [vmem:[%s286 + $0x1c0] sm:$0xff] %v1366
          %1431 = vst [vmem:[%s286 + $0x1c8] sm:$0xff] %v1367
          %1432 = vst [vmem:[%s286 + $0x1d0] sm:$0xff] %v1368
          %1433 = vst [vmem:[%s286 + $0x1d8] sm:$0xff] %v1369
          %1434 = vst [vmem:[%s286 + $0x1e0] sm:$0xff] %v1370
          %1435 = vst [vmem:[%s286 + $0x1e8] sm:$0xff] %v1371
          %1436 = vst [vmem:[%s286 + $0x1f0] sm:$0xff] %v1372
          %1437 = vst [vmem:[%s286 + $0x1f8] sm:$0xff] %v1373
        $region48: #{tpu_custom_call.1} parent=35 // pred_fallthru
          _
        %s1438 = sand.u32 %s165, 1
        %s1439 = scalar_lea.sflag [#allocation8], %s1438
        %s1440 = sand.u32 %s165, 1
        %s1441 = smul.addr %s1440, 512
        %s1442 = scalar_lea.vmem [#allocation7], %s1441
        // Predicated region
        $region53: #{tpu_custom_call.1} parent=35 // pred_check
          %p1443 = pneg %p175
        $region54: #{tpu_custom_call.1} parent=35 // pred_check_branch
          %1445 = sbr.rel (%p1443) target = $region56
        $region55: #{tpu_custom_call.1} parent=35 // pred_region
          %s1446 = smul.u32 %s24, %s23
          %s1447 = smul.u32 %s25, %s23
          %s1448 = smul.u32 64, %s1447
          %1450 = vsyncadd %s1439, 0
          %s1451 = smul.addr %s1446, 64
          %s1452 = sadd.s32 %s1448, %s1451
          %s1453 = smul.addr %s1452, 8
          %s1454 = scalar_lea.hbm %s4, %s1453
          %s1455 = sshll.u32 %s1442, 4
          %s1456 = int_to_ptr.vmem [resolvable:$true] %s1455
          %s1457 = sshll.u32 %s1454, 4
          %s1458 = int_to_ptr.hbm [resolvable:$true] %s1457
          %1463 = dma.vmem_to_hbm [thread:$0]  %s1456, 8192, %s1458, %s1439, 128, 128, 8
        $region56: #{tpu_custom_call.1} parent=35 // pred_fallthru
          _
      $region36: #{tpu_custom_call.1} parent=5 // pred_fallthru
        _
      %p1464 = scmp.le.s32.totalorder 2, %s13
      // Predicated region
      $region57: #{tpu_custom_call.1} parent=5 // pred_check
        %p1465 = pneg %p1464
      $region58: #{tpu_custom_call.1} parent=5 // pred_check_branch
        %1467 = sbr.rel (%p1465) target = $region60
      $region59: #{tpu_custom_call.1} parent=5 // pred_region
        %s1468 = ssub.s32 %s13, 2
        // Predicated region
        $region61: #{tpu_custom_call.1} parent=59 // pred_check
          %p1469 = pneg %p181
        $region62: #{tpu_custom_call.1} parent=59 // pred_check_branch
          %1471 = sbr.rel (%p1469) target = $region64
        $region63: #{tpu_custom_call.1} parent=59 // pred_region
          %s1472 = sand.u32 %s166, 1
          %s1473 = scalar_lea.sflag [#allocation8], %s1472
          %s1474 = sand.u32 %s166, 1
          %s1475 = smul.addr %s1474, 512
          %s1476 = scalar_lea.vmem [#allocation7], %s1475
          %1478 = dma.done %s1473, 8192
        $region64: #{tpu_custom_call.1} parent=59 // pred_fallthru
          _
      $region60: #{tpu_custom_call.1} parent=5 // pred_fallthru
        _
    $region6: #{tpu_custom_call.1} parent=1 // loop_footer
      %s17 = sadd.s32 1, %s13
    $region7: #{tpu_custom_call.1} parent=1 // loop_footer_branch
      %12 = sbr.rel target = $region3
    $region8: #{tpu_custom_call.1} parent=1 // loop_exit
      _
    %1479 = vsyncpa [#allocation8], 1
    %s1480 = scalar_lea.sflag [#allocation8], 1
    %1481 = vsyncpa %s1480, 1

</llo_original>
